<compile_context>
chip_gen: v7x
topology: tpu7x:2x2x1
jax: 0.10.0
libtpu: 0.0.40
codegen_flags: <defaults>
</compile_context>

<pallas_src>
import jax
import jax.numpy as jnp
from jax.experimental import pallas as pl
from jax.experimental.pallas import tpu as pltpu

D_IN = 8            # features per pixel (e.g. spectral bands)
H1, H2, H3 = 128, 64, 16
TB = 512            # batch tile (rides the 128-lane axis)
BATCH = 1024        # example batch -> 2 grid steps (both v7x cores busy)
BN_EPS = 1e-5


def single_pixel_fc_kernel(x_ref,
                           w1_ref, b1_ref, w2_ref, b2_ref,
                           w3_ref, b3_ref, w4_ref, b4_ref, o_ref):
    # Activations are (features, TB): batch on the 128-lane axis.
    x = x_ref[...]                                              # (D_IN, TB)

    # fc1 (BatchNorm already folded into w1/b1 on host) -> tanh; dropout = id.
    h = jnp.tanh(jnp.dot(w1_ref[...], x,
                         preferred_element_type=jnp.float32) + b1_ref[...])
    # fc2 -> tanh
    h = jnp.tanh(jnp.dot(w2_ref[...], h,
                         preferred_element_type=jnp.float32) + b2_ref[...])
    # fc3 -> tanh
    h = jnp.tanh(jnp.dot(w3_ref[...], h,
                         preferred_element_type=jnp.float32) + b3_ref[...])
    # out -> sigmoid; (1, TB) lane-dense store.
    y = jnp.dot(w4_ref[...], h,
                preferred_element_type=jnp.float32) + b4_ref[...]
    o_ref[...] = jax.nn.sigmoid(y)


def single_pixel_fc(x, params):
    """x: (B, D_IN) float32. Returns (B, 1) float32."""
    B, D = x.shape
    assert D == D_IN

    (gamma, beta, run_mean, run_var,
     w1, b1, w2, b2, w3, b3, w4, b4) = params

    # ---- host-side prep (layout plumbing + BN folding) ----------------------
    # Inference BatchNorm:  bn(x) = scale * x + shift
    #   scale = gamma / sqrt(var + eps),  shift = beta - mean * scale
    # Folded into fc1:      fc1(bn(x)) = (w1 * scale) @ x + (w1 @ shift + b1)
    scale = gamma * jax.lax.rsqrt(run_var + BN_EPS)             # (D_IN,)
    shift = beta - run_mean * scale                             # (D_IN,)
    w1f = w1 * scale[None, :]                                   # (H1, D_IN)
    b1f = b1 + w1 @ shift[:, None]                              # (H1, 1)

    # Pad batch to a multiple of TB, transpose so batch is on the lane axis.
    Bp = pl.cdiv(B, TB) * TB
    if Bp != B:
        x = jnp.pad(x, ((0, Bp - B), (0, 0)))
    xt = x.T                                                    # (D_IN, Bp)

    def rep_spec(arr):
        # Full-array block, replicated across the batch grid.
        nd = arr.ndim
        return pl.BlockSpec(arr.shape, lambda i, nd=nd: (0,) * nd)

    out_t = pl.pallas_call(
        single_pixel_fc_kernel,
        out_shape=jax.ShapeDtypeStruct((1, Bp), jnp.float32),
        grid=(Bp // TB,),
        in_specs=[
            pl.BlockSpec((D_IN, TB), lambda i: (0, i)),         # x, batch-tiled
            rep_spec(w1f), rep_spec(b1f),
            rep_spec(w2), rep_spec(b2),
            rep_spec(w3), rep_spec(b3),
            rep_spec(w4), rep_spec(b4),
        ],
        out_specs=pl.BlockSpec((1, TB), lambda i: (0, i)),      # lane-dense
        compiler_params=pltpu.CompilerParams(
            dimension_semantics=("parallel",)),
    )(xt, w1f, b1f, w2, b2, w3, b3, w4, b4)

    return out_t[:, :B].reshape(B, 1)


def init_params(key):
    ks = jax.random.split(key, 10)

    def linear(kw, kb, fan_in, fan_out):
        # PyTorch Linear init: U(-1/sqrt(fan_in), 1/sqrt(fan_in)); stored (out, in).
        bound = 1.0 / jnp.sqrt(jnp.float32(fan_in))
        w = jax.random.uniform(kw, (fan_out, fan_in), jnp.float32, -bound, bound)
        b = jax.random.uniform(kb, (fan_out, 1), jnp.float32, -bound, bound)
        return w, b

    gamma = jnp.ones((D_IN,), jnp.float32)                       # BN weight
    beta = jnp.zeros((D_IN,), jnp.float32)                       # BN bias
    run_mean = 0.1 * jax.random.normal(ks[8], (D_IN,), jnp.float32)
    run_var = 1.0 + 0.1 * jax.random.uniform(ks[9], (D_IN,), jnp.float32)
    w1, b1 = linear(ks[0], ks[1], D_IN, H1)
    w2, b2 = linear(ks[2], ks[3], H1, H2)
    w3, b3 = linear(ks[4], ks[5], H2, H3)
    w4, b4 = linear(ks[6], ks[7], H3, 1)
    return (gamma, beta, run_mean, run_var, w1, b1, w2, b2, w3, b3, w4, b4)


def reference(x, params):
    (gamma, beta, run_mean, run_var,
     w1, b1, w2, b2, w3, b3, w4, b4) = params
    h = (x - run_mean) * (gamma / jnp.sqrt(run_var + BN_EPS)) + beta
    h = jnp.tanh(h @ w1.T + b1[:, 0])
    h = jnp.tanh(h @ w2.T + b2[:, 0])
    h = jnp.tanh(h @ w3.T + b3[:, 0])
    return jax.nn.sigmoid(h @ w4.T + b4[:, 0])


if __name__ == "__main__":
    key = jax.random.PRNGKey(0)
    kx, kp = jax.random.split(key)
    x = jax.random.normal(kx, (BATCH, D_IN), jnp.float32)
    params = init_params(kp)

    out = single_pixel_fc(x, params)
    out = jax.block_until_ready(out)

    ref = reference(x, params)
    assert out.shape == (BATCH, 1)
    assert jnp.allclose(out, ref, atol=1e-5, rtol=1e-5), "mismatch vs reference"
    print("KERNEL_OK")
</pallas_src>

<mosaic_0001>
module attributes {stable_mosaic.version = 11 : i64} {
  func.func @single_pixel_fc_kernel(%arg0: i32, %arg1: memref<8x512xf32, #tpu.memory_space<vmem>>, %arg2: memref<128x8xf32, #tpu.memory_space<vmem>>, %arg3: memref<128x1xf32, #tpu.memory_space<vmem>>, %arg4: memref<64x128xf32, #tpu.memory_space<vmem>>, %arg5: memref<64x1xf32, #tpu.memory_space<vmem>>, %arg6: memref<16x64xf32, #tpu.memory_space<vmem>>, %arg7: memref<16x1xf32, #tpu.memory_space<vmem>>, %arg8: memref<1x16xf32, #tpu.memory_space<vmem>>, %arg9: memref<1x1xf32, #tpu.memory_space<vmem>>, %arg10: memref<1x512xf32, #tpu.memory_space<vmem>>) attributes {dimension_semantics = [#tpu.dimension_semantics<parallel>], iteration_bounds = array<i64: 2>, scalar_prefetch = 0 : i64, scratch_operands = 0 : i64, tpu.core_type = #tpu.core_type<tc>, window_params = [{transform_indices = @transform_0, window_bounds = array<i64: 8, 512>}, {pipeline_mode = #tpu.pipeline_mode<synchronous>, transform_indices = @transform_1, window_bounds = array<i64: 128, 8>}, {pipeline_mode = #tpu.pipeline_mode<synchronous>, transform_indices = @transform_2, window_bounds = array<i64: 128, 1>}, {pipeline_mode = #tpu.pipeline_mode<synchronous>, transform_indices = @transform_3, window_bounds = array<i64: 64, 128>}, {pipeline_mode = #tpu.pipeline_mode<synchronous>, transform_indices = @transform_4, window_bounds = array<i64: 64, 1>}, {pipeline_mode = #tpu.pipeline_mode<synchronous>, transform_indices = @transform_5, window_bounds = array<i64: 16, 64>}, {pipeline_mode = #tpu.pipeline_mode<synchronous>, transform_indices = @transform_6, window_bounds = array<i64: 16, 1>}, {pipeline_mode = #tpu.pipeline_mode<synchronous>, transform_indices = @transform_7, window_bounds = array<i64: 1, 16>}, {pipeline_mode = #tpu.pipeline_mode<synchronous>, transform_indices = @transform_8, window_bounds = array<i64: 1, 1>}, {transform_indices = @transform_9, window_bounds = array<i64: 1, 512>}]} {
    %c0 = arith.constant 0 : index
    %c0_0 = arith.constant 0 : index
    %0 = vector.load %arg1[%c0, %c0_0] : memref<8x512xf32, #tpu.memory_space<vmem>>, vector<8x512xf32>
    %c0_1 = arith.constant 0 : index
    %c0_2 = arith.constant 0 : index
    %1 = vector.load %arg2[%c0_1, %c0_2] : memref<128x8xf32, #tpu.memory_space<vmem>>, vector<128x8xf32>
    %cst = arith.constant dense<0.000000e+00> : vector<128x512xf32>
    %2 = tpu.matmul %1, %0, %cst {dimension_numbers = #tpu.dot_dimension_numbers<[1], [0], [0], [1], [0, 0, 1, 1], [], []>} : vector<128x8xf32>, vector<8x512xf32>, vector<128x512xf32> -> vector<128x512xf32>
    %c0_3 = arith.constant 0 : index
    %c0_4 = arith.constant 0 : index
    %3 = vector.load %arg3[%c0_3, %c0_4] : memref<128x1xf32, #tpu.memory_space<vmem>>, vector<128x1xf32>
    %4 = vector.broadcast %3 : vector<128x1xf32> to vector<128x512xf32>
    %5 = arith.addf %2, %4 : vector<128x512xf32>
    %6 = math.tanh %5 : vector<128x512xf32>
    %c0_5 = arith.constant 0 : index
    %c0_6 = arith.constant 0 : index
    %7 = vector.load %arg4[%c0_5, %c0_6] : memref<64x128xf32, #tpu.memory_space<vmem>>, vector<64x128xf32>
    %cst_7 = arith.constant dense<0.000000e+00> : vector<64x512xf32>
    %8 = tpu.matmul %7, %6, %cst_7 {dimension_numbers = #tpu.dot_dimension_numbers<[1], [0], [0], [1], [0, 0, 1, 1], [], []>} : vector<64x128xf32>, vector<128x512xf32>, vector<64x512xf32> -> vector<64x512xf32>
    %c0_8 = arith.constant 0 : index
    %c0_9 = arith.constant 0 : index
    %9 = vector.load %arg5[%c0_8, %c0_9] : memref<64x1xf32, #tpu.memory_space<vmem>>, vector<64x1xf32>
    %10 = vector.broadcast %9 : vector<64x1xf32> to vector<64x512xf32>
    %11 = arith.addf %8, %10 : vector<64x512xf32>
    %12 = math.tanh %11 : vector<64x512xf32>
    %c0_10 = arith.constant 0 : index
    %c0_11 = arith.constant 0 : index
    %13 = vector.load %arg6[%c0_10, %c0_11] : memref<16x64xf32, #tpu.memory_space<vmem>>, vector<16x64xf32>
    %cst_12 = arith.constant dense<0.000000e+00> : vector<16x512xf32>
    %14 = tpu.matmul %13, %12, %cst_12 {dimension_numbers = #tpu.dot_dimension_numbers<[1], [0], [0], [1], [0, 0, 1, 1], [], []>} : vector<16x64xf32>, vector<64x512xf32>, vector<16x512xf32> -> vector<16x512xf32>
    %c0_13 = arith.constant 0 : index
    %c0_14 = arith.constant 0 : index
    %15 = vector.load %arg7[%c0_13, %c0_14] : memref<16x1xf32, #tpu.memory_space<vmem>>, vector<16x1xf32>
    %16 = vector.broadcast %15 : vector<16x1xf32> to vector<16x512xf32>
    %17 = arith.addf %14, %16 : vector<16x512xf32>
    %18 = math.tanh %17 : vector<16x512xf32>
    %c0_15 = arith.constant 0 : index
    %c0_16 = arith.constant 0 : index
    %19 = vector.load %arg8[%c0_15, %c0_16] : memref<1x16xf32, #tpu.memory_space<vmem>>, vector<1x16xf32>
    %cst_17 = arith.constant dense<0.000000e+00> : vector<1x512xf32>
    %20 = tpu.matmul %19, %18, %cst_17 {dimension_numbers = #tpu.dot_dimension_numbers<[1], [0], [0], [1], [0, 0, 1, 1], [], []>} : vector<1x16xf32>, vector<16x512xf32>, vector<1x512xf32> -> vector<1x512xf32>
    %c0_18 = arith.constant 0 : index
    %c0_19 = arith.constant 0 : index
    %21 = vector.load %arg9[%c0_18, %c0_19] : memref<1x1xf32, #tpu.memory_space<vmem>>, vector<1x1xf32>
    %22 = vector.broadcast %21 : vector<1x1xf32> to vector<1x512xf32>
    %23 = arith.addf %20, %22 : vector<1x512xf32>
    %24 = arith.negf %23 : vector<1x512xf32>
    %25 = math.exp %24 : vector<1x512xf32>
    %cst_20 = arith.constant 1.000000e+00 : f32
    %26 = vector.broadcast %cst_20 : f32 to vector<1x512xf32>
    %27 = arith.addf %26, %25 : vector<1x512xf32>
    %28 = arith.divf %26, %27 : vector<1x512xf32>
    %c0_21 = arith.constant 0 : index
    %c0_22 = arith.constant 0 : index
    %29 = vector.load %arg10[%c0_21, %c0_22] : memref<1x512xf32, #tpu.memory_space<vmem>>, vector<1x512xf32>
    tpu.vector_store %arg10[%c0_21, %c0_22], %28 {strides = array<i32>} : memref<1x512xf32, #tpu.memory_space<vmem>>, vector<1x512xf32>,
    return
  }
  func.func @transform_0(%arg0: i32) -> (i32, i32) {
    %c0_i32 = arith.constant 0 : i32
    %c0_i32_0 = arith.constant 0 : i32
    return %c0_i32, %arg0 : i32, i32
  }
  func.func @transform_1(%arg0: i32) -> (i32, i32) {
    %c0_i32 = arith.constant 0 : i32
    %c0_i32_0 = arith.constant 0 : i32
    %c0_i32_1 = arith.constant 0 : i32
    return %c0_i32, %c0_i32_0 : i32, i32
  }
  func.func @transform_2(%arg0: i32) -> (i32, i32) {
    %c0_i32 = arith.constant 0 : i32
    %c0_i32_0 = arith.constant 0 : i32
    %c0_i32_1 = arith.constant 0 : i32
    return %c0_i32, %c0_i32_0 : i32, i32
  }
  func.func @transform_3(%arg0: i32) -> (i32, i32) {
    %c0_i32 = arith.constant 0 : i32
    %c0_i32_0 = arith.constant 0 : i32
    %c0_i32_1 = arith.constant 0 : i32
    return %c0_i32, %c0_i32_0 : i32, i32
  }
  func.func @transform_4(%arg0: i32) -> (i32, i32) {
    %c0_i32 = arith.constant 0 : i32
    %c0_i32_0 = arith.constant 0 : i32
    %c0_i32_1 = arith.constant 0 : i32
    return %c0_i32, %c0_i32_0 : i32, i32
  }
  func.func @transform_5(%arg0: i32) -> (i32, i32) {
    %c0_i32 = arith.constant 0 : i32
    %c0_i32_0 = arith.constant 0 : i32
    %c0_i32_1 = arith.constant 0 : i32
    return %c0_i32, %c0_i32_0 : i32, i32
  }
  func.func @transform_6(%arg0: i32) -> (i32, i32) {
    %c0_i32 = arith.constant 0 : i32
    %c0_i32_0 = arith.constant 0 : i32
    %c0_i32_1 = arith.constant 0 : i32
    return %c0_i32, %c0_i32_0 : i32, i32
  }
  func.func @transform_7(%arg0: i32) -> (i32, i32) {
    %c0_i32 = arith.constant 0 : i32
    %c0_i32_0 = arith.constant 0 : i32
    %c0_i32_1 = arith.constant 0 : i32
    return %c0_i32, %c0_i32_0 : i32, i32
  }
  func.func @transform_8(%arg0: i32) -> (i32, i32) {
    %c0_i32 = arith.constant 0 : i32
    %c0_i32_0 = arith.constant 0 : i32
    %c0_i32_1 = arith.constant 0 : i32
    return %c0_i32, %c0_i32_0 : i32, i32
  }
  func.func @transform_9(%arg0: i32) -> (i32, i32) {
    %c0_i32 = arith.constant 0 : i32
    %c0_i32_0 = arith.constant 0 : i32
    return %c0_i32, %arg0 : i32, i32
  }
}

</mosaic_0001>

<llo_original>
// kernel: tpu_custom_call.1
$region0: #{tpu_custom_call.1}
  #allocation0 [shape = 'u32[]', space=smem, size = 0x4, offset = 0x4, fixed_abs, tag = 'smem constant byte address 0x4 - core index']
  #allocation1 [shape = 'u32[144,128]{1,0:T(1,128)}', space=vmem, size = 0x12000, scoped, tag = 'internal scratch']
  #allocation2 [shape = 'f32[1,1]{1,0:T(1,128)S(1)}', space=vmem, size = 0x200, scoped, tag = 'scoped memory for tpu_custom_call.1']
  %s0 = inlined_call_operand.vmem [shape: f32[8,1024], index: 0, kind: input, shape index: {}]
  %s1 = inlined_call_operand.vmem [shape: f32[128,8], index: 1, kind: input, shape index: {}]
  %s2 = inlined_call_operand.vmem [shape: f32[128,1], index: 2, kind: input, shape index: {}]
  %s3 = inlined_call_operand.vmem [shape: f32[64,128], index: 3, kind: input, shape index: {}]
  %s4 = inlined_call_operand.vmem [shape: f32[64,1], index: 4, kind: input, shape index: {}]
  %s5 = inlined_call_operand.vmem [shape: f32[16,64], index: 5, kind: input, shape index: {}]
  %s6 = inlined_call_operand.vmem [shape: f32[16,1], index: 6, kind: input, shape index: {}]
  %s7 = inlined_call_operand.vmem [shape: f32[1,16], index: 7, kind: input, shape index: {}]
  %s8 = inlined_call_operand.<no memory space> [shape: f32[1,1], index: 8, kind: input, shape index: {}]
  %s9 = inlined_call_operand.hbm [shape: f32[1,1024], index: 9, kind: output, shape index: {}]
  %s10 = sld [smem:[#allocation0]]
  $region69: #{tpu_custom_call.1} parent=0
    _
  %s12 = ssub.s32 1, %s10
  %s13 = scalar_select 0, %s12, %s10
  %v14 = vstv %s8
  %15 = vst [vmem:[#allocation2] sm:$0x1] %v14
  $region1: #{tpu_custom_call.1} parent=0
    #allocation3 [shape = 'u8[4096]{0}', space=vmem, size = 0x1000, scoped, tag = 'output window, operand 0']
    #allocation4 [shape = 's32[2]{0}', space=sflag, size = 0x8, scoped, tag = 'scoped memory for tpu_custom_call.1']
    %16 = vsyncpa [#allocation4], 0
    %s17 = scalar_lea.sflag [#allocation4], 1
    %18 = vsyncpa %s17, 0
    loop: start=0, step=1, limit=4
    $region2: #{tpu_custom_call.1} parent=1 // loop_pre_header
      _
    $region3: #{tpu_custom_call.1} parent=1 // loop_header
      %s20 = sphi 0, %s24
      %p21 = scmp.ge.s32.totalorder %s20, 4
      %s30 = sphi 0, %s32
      %s33 = sphi 0, %s30
      %s34 = sphi 0, %s33
      %s50 = sphi 0, %s34
      %s54 = sphi 0, %s54
      %s56 = sphi 0, %s54
      %s57 = sphi 0, %s56
      %s71 = sphi 0, %s57
      %s75 = sphi 0, %s75
      %s77 = sphi 0, %s75
      %s78 = sphi 0, %s77
      %s92 = sphi 0, %s78
      %s96 = sphi 0, %s96
      %s98 = sphi 0, %s96
      %s99 = sphi 0, %s98
      %s113 = sphi 0, %s99
      %s117 = sphi 0, %s117
      %s119 = sphi 0, %s117
      %s120 = sphi 0, %s119
      %s134 = sphi 0, %s120
      %s138 = sphi 0, %s138
      %s140 = sphi 0, %s138
      %s141 = sphi 0, %s140
      %s155 = sphi 0, %s141
      %s159 = sphi 0, %s159
      %s161 = sphi 0, %s159
      %s162 = sphi 0, %s161
      %s176 = sphi 0, %s162
      %s180 = sphi 0, %s180
      %s182 = sphi 0, %s180
      %s183 = sphi 0, %s182
      %s197 = sphi 0, %s183
      %s201 = sphi 0, %s201
      %s203 = sphi 0, %s201
      %s204 = sphi 0, %s203
      %s218 = sphi 0, %s204
      %s224 = sphi 0, %s226
      %s227 = sphi 0, %s224
      %s228 = sphi 0, %s227
      %s244 = sphi 0, %s228
    $region4: #{tpu_custom_call.1} parent=1 // loop_header_branch
      %23 = sbr.rel (%p21) target = $region8
    $region5: #{tpu_custom_call.1} parent=1 // loop_body
      %s25 = ssub.s32 %s20, 1
      %s26 = ssub.s32 %s20, 2
      %s27 = sadd.s32 %s20, 1
      %s28 = ssub.s32 %s20, %s27
      %p29 = scmp.eq.s32.totalorder %s28, 0
      %s31 = sadd.s32 %s30, 1
      %s32 = scalar_select %p29, %s30, %s31
      %p35 = pneg %p29
      %p36 = scmp.eq.s32.totalorder %s20, 1
      %p37 = por %p35, %p36
      %p38 = scmp.ne.s32.totalorder %s30, %s33
      %p39 = scmp.eq.s32.totalorder %s20, 0
      %p40 = por %p38, %p39
      %p41 = scmp.ne.s32.totalorder %s30, %s33
      %p42 = scmp.eq.s32.totalorder %s25, 1
      %p43 = por %p41, %p42
      %p44 = scmp.ne.s32.totalorder %s33, %s34
      %p45 = scmp.eq.s32.totalorder %s25, 0
      %p46 = por %p44, %p45
      %p47 = scmp.ne.s32.totalorder %s33, %s34
      %p48 = scmp.eq.s32.totalorder %s26, 1
      %p49 = por %p47, %p48
      %p51 = scmp.ne.s32.totalorder %s34, %s50
      %p52 = scmp.eq.s32.totalorder %s26, 0
      %p53 = por %p51, %p52
      %s55 = sadd.s32 %s54, 1
      %p58 = scmp.eq.s32.totalorder %s20, 1
      %p59 = scmp.ne.s32.totalorder %s54, %s56
      %p60 = scmp.eq.s32.totalorder %s20, 0
      %p61 = por %p59, %p60
      %p62 = scmp.ne.s32.totalorder %s54, %s56
      %p63 = scmp.eq.s32.totalorder %s25, 1
      %p64 = por %p62, %p63
      %p65 = scmp.ne.s32.totalorder %s56, %s57
      %p66 = scmp.eq.s32.totalorder %s25, 0
      %p67 = por %p65, %p66
      %p68 = scmp.ne.s32.totalorder %s56, %s57
      %p69 = scmp.eq.s32.totalorder %s26, 1
      %p70 = por %p68, %p69
      %p72 = scmp.ne.s32.totalorder %s57, %s71
      %p73 = scmp.eq.s32.totalorder %s26, 0
      %p74 = por %p72, %p73
      %s76 = sadd.s32 %s75, 1
      %p79 = scmp.eq.s32.totalorder %s20, 1
      %p80 = scmp.ne.s32.totalorder %s75, %s77
      %p81 = scmp.eq.s32.totalorder %s20, 0
      %p82 = por %p80, %p81
      %p83 = scmp.ne.s32.totalorder %s75, %s77
      %p84 = scmp.eq.s32.totalorder %s25, 1
      %p85 = por %p83, %p84
      %p86 = scmp.ne.s32.totalorder %s77, %s78
      %p87 = scmp.eq.s32.totalorder %s25, 0
      %p88 = por %p86, %p87
      %p89 = scmp.ne.s32.totalorder %s77, %s78
      %p90 = scmp.eq.s32.totalorder %s26, 1
      %p91 = por %p89, %p90
      %p93 = scmp.ne.s32.totalorder %s78, %s92
      %p94 = scmp.eq.s32.totalorder %s26, 0
      %p95 = por %p93, %p94
      %s97 = sadd.s32 %s96, 1
      %p100 = scmp.eq.s32.totalorder %s20, 1
      %p101 = scmp.ne.s32.totalorder %s96, %s98
      %p102 = scmp.eq.s32.totalorder %s20, 0
      %p103 = por %p101, %p102
      %p104 = scmp.ne.s32.totalorder %s96, %s98
      %p105 = scmp.eq.s32.totalorder %s25, 1
      %p106 = por %p104, %p105
      %p107 = scmp.ne.s32.totalorder %s98, %s99
      %p108 = scmp.eq.s32.totalorder %s25, 0
      %p109 = por %p107, %p108
      %p110 = scmp.ne.s32.totalorder %s98, %s99
      %p111 = scmp.eq.s32.totalorder %s26, 1
      %p112 = por %p110, %p111
      %p114 = scmp.ne.s32.totalorder %s99, %s113
      %p115 = scmp.eq.s32.totalorder %s26, 0
      %p116 = por %p114, %p115
      %s118 = sadd.s32 %s117, 1
      %p121 = scmp.eq.s32.totalorder %s20, 1
      %p122 = scmp.ne.s32.totalorder %s117, %s119
      %p123 = scmp.eq.s32.totalorder %s20, 0
      %p124 = por %p122, %p123
      %p125 = scmp.ne.s32.totalorder %s117, %s119
      %p126 = scmp.eq.s32.totalorder %s25, 1
      %p127 = por %p125, %p126
      %p128 = scmp.ne.s32.totalorder %s119, %s120
      %p129 = scmp.eq.s32.totalorder %s25, 0
      %p130 = por %p128, %p129
      %p131 = scmp.ne.s32.totalorder %s119, %s120
      %p132 = scmp.eq.s32.totalorder %s26, 1
      %p133 = por %p131, %p132
      %p135 = scmp.ne.s32.totalorder %s120, %s134
      %p136 = scmp.eq.s32.totalorder %s26, 0
      %p137 = por %p135, %p136
      %s139 = sadd.s32 %s138, 1
      %p142 = scmp.eq.s32.totalorder %s20, 1
      %p143 = scmp.ne.s32.totalorder %s138, %s140
      %p144 = scmp.eq.s32.totalorder %s20, 0
      %p145 = por %p143, %p144
      %p146 = scmp.ne.s32.totalorder %s138, %s140
      %p147 = scmp.eq.s32.totalorder %s25, 1
      %p148 = por %p146, %p147
      %p149 = scmp.ne.s32.totalorder %s140, %s141
      %p150 = scmp.eq.s32.totalorder %s25, 0
      %p151 = por %p149, %p150
      %p152 = scmp.ne.s32.totalorder %s140, %s141
      %p153 = scmp.eq.s32.totalorder %s26, 1
      %p154 = por %p152, %p153
      %p156 = scmp.ne.s32.totalorder %s141, %s155
      %p157 = scmp.eq.s32.totalorder %s26, 0
      %p158 = por %p156, %p157
      %s160 = sadd.s32 %s159, 1
      %p163 = scmp.eq.s32.totalorder %s20, 1
      %p164 = scmp.ne.s32.totalorder %s159, %s161
      %p165 = scmp.eq.s32.totalorder %s20, 0
      %p166 = por %p164, %p165
      %p167 = scmp.ne.s32.totalorder %s159, %s161
      %p168 = scmp.eq.s32.totalorder %s25, 1
      %p169 = por %p167, %p168
      %p170 = scmp.ne.s32.totalorder %s161, %s162
      %p171 = scmp.eq.s32.totalorder %s25, 0
      %p172 = por %p170, %p171
      %p173 = scmp.ne.s32.totalorder %s161, %s162
      %p174 = scmp.eq.s32.totalorder %s26, 1
      %p175 = por %p173, %p174
      %p177 = scmp.ne.s32.totalorder %s162, %s176
      %p178 = scmp.eq.s32.totalorder %s26, 0
      %p179 = por %p177, %p178
      %s181 = sadd.s32 %s180, 1
      %p184 = scmp.eq.s32.totalorder %s20, 1
      %p185 = scmp.ne.s32.totalorder %s180, %s182
      %p186 = scmp.eq.s32.totalorder %s20, 0
      %p187 = por %p185, %p186
      %p188 = scmp.ne.s32.totalorder %s180, %s182
      %p189 = scmp.eq.s32.totalorder %s25, 1
      %p190 = por %p188, %p189
      %p191 = scmp.ne.s32.totalorder %s182, %s183
      %p192 = scmp.eq.s32.totalorder %s25, 0
      %p193 = por %p191, %p192
      %p194 = scmp.ne.s32.totalorder %s182, %s183
      %p195 = scmp.eq.s32.totalorder %s26, 1
      %p196 = por %p194, %p195
      %p198 = scmp.ne.s32.totalorder %s183, %s197
      %p199 = scmp.eq.s32.totalorder %s26, 0
      %p200 = por %p198, %p199
      %s202 = sadd.s32 %s201, 1
      %p205 = scmp.eq.s32.totalorder %s20, 1
      %p206 = scmp.ne.s32.totalorder %s201, %s203
      %p207 = scmp.eq.s32.totalorder %s20, 0
      %p208 = por %p206, %p207
      %p209 = scmp.ne.s32.totalorder %s201, %s203
      %p210 = scmp.eq.s32.totalorder %s25, 1
      %p211 = por %p209, %p210
      %p212 = scmp.ne.s32.totalorder %s203, %s204
      %p213 = scmp.eq.s32.totalorder %s25, 0
      %p214 = por %p212, %p213
      %p215 = scmp.ne.s32.totalorder %s203, %s204
      %p216 = scmp.eq.s32.totalorder %s26, 1
      %p217 = por %p215, %p216
      %p219 = scmp.ne.s32.totalorder %s204, %s218
      %p220 = scmp.eq.s32.totalorder %s26, 0
      %p221 = por %p219, %p220
      %s222 = ssub.s32 %s20, %s27
      %p223 = scmp.eq.s32.totalorder %s222, 0
      %s225 = sadd.s32 %s224, 1
      %s226 = scalar_select %p223, %s224, %s225
      %p229 = pneg %p223
      %p230 = scmp.eq.s32.totalorder %s20, 1
      %p231 = por %p229, %p230
      %p232 = scmp.ne.s32.totalorder %s224, %s227
      %p233 = scmp.eq.s32.totalorder %s20, 0
      %p234 = por %p232, %p233
      %p235 = scmp.ne.s32.totalorder %s224, %s227
      %p236 = scmp.eq.s32.totalorder %s25, 1
      %p237 = por %p235, %p236
      %p238 = scmp.ne.s32.totalorder %s227, %s228
      %p239 = scmp.eq.s32.totalorder %s25, 0
      %p240 = por %p238, %p239
      %p241 = scmp.ne.s32.totalorder %s227, %s228
      %p242 = scmp.eq.s32.totalorder %s26, 1
      %p243 = por %p241, %p242
      %p245 = scmp.ne.s32.totalorder %s228, %s244
      %p246 = scmp.eq.s32.totalorder %s26, 0
      %p247 = por %p245, %p246
      %p248 = scmp.le.s32.totalorder 1, %s20
      %p249 = scmp.lt.s32.totalorder %s20, 3
      %p250 = pnand %p248, %p249
      %p251 = pneg %p250
      // Predicated region
      $region9: #{tpu_custom_call.1} parent=5 // pred_check
        _
      $region10: #{tpu_custom_call.1} parent=5 // pred_check_branch
        %253 = sbr.rel (%p250) target = $region12
      $region11: #{tpu_custom_call.1} parent=5 // pred_region
        %s254 = ssub.s32 %s20, 1
        // Predicated region
        $region13: #{tpu_custom_call.1} parent=11 // pred_check
          %p255 = pneg %p67
        $region14: #{tpu_custom_call.1} parent=11 // pred_check_branch
          %257 = sbr.rel (%p255) target = $region16
        $region15: #{tpu_custom_call.1} parent=11 // pred_region
          _
        $region16: #{tpu_custom_call.1} parent=11 // pred_fallthru
          _
        // Predicated region
        $region17: #{tpu_custom_call.1} parent=11 // pred_check
          %p258 = pneg %p88
        $region18: #{tpu_custom_call.1} parent=11 // pred_check_branch
          %260 = sbr.rel (%p258) target = $region20
        $region19: #{tpu_custom_call.1} parent=11 // pred_region
          _
        $region20: #{tpu_custom_call.1} parent=11 // pred_fallthru
          _
        // Predicated region
        $region21: #{tpu_custom_call.1} parent=11 // pred_check
          %p261 = pneg %p109
        $region22: #{tpu_custom_call.1} parent=11 // pred_check_branch
          %263 = sbr.rel (%p261) target = $region24
        $region23: #{tpu_custom_call.1} parent=11 // pred_region
          _
        $region24: #{tpu_custom_call.1} parent=11 // pred_fallthru
          _
        // Predicated region
        $region25: #{tpu_custom_call.1} parent=11 // pred_check
          %p264 = pneg %p130
        $region26: #{tpu_custom_call.1} parent=11 // pred_check_branch
          %266 = sbr.rel (%p264) target = $region28
        $region27: #{tpu_custom_call.1} parent=11 // pred_region
          _
        $region28: #{tpu_custom_call.1} parent=11 // pred_fallthru
          _
        // Predicated region
        $region29: #{tpu_custom_call.1} parent=11 // pred_check
          %p267 = pneg %p151
        $region30: #{tpu_custom_call.1} parent=11 // pred_check_branch
          %269 = sbr.rel (%p267) target = $region32
        $region31: #{tpu_custom_call.1} parent=11 // pred_region
          _
        $region32: #{tpu_custom_call.1} parent=11 // pred_fallthru
          _
        // Predicated region
        $region33: #{tpu_custom_call.1} parent=11 // pred_check
          %p270 = pneg %p172
        $region34: #{tpu_custom_call.1} parent=11 // pred_check_branch
          %272 = sbr.rel (%p270) target = $region36
        $region35: #{tpu_custom_call.1} parent=11 // pred_region
          _
        $region36: #{tpu_custom_call.1} parent=11 // pred_fallthru
          _
        // Predicated region
        $region37: #{tpu_custom_call.1} parent=11 // pred_check
          %p273 = pneg %p193
        $region38: #{tpu_custom_call.1} parent=11 // pred_check_branch
          %275 = sbr.rel (%p273) target = $region40
        $region39: #{tpu_custom_call.1} parent=11 // pred_region
          _
        $region40: #{tpu_custom_call.1} parent=11 // pred_fallthru
          _
        // Predicated region
        $region41: #{tpu_custom_call.1} parent=11 // pred_check
          %p276 = pneg %p214
        $region42: #{tpu_custom_call.1} parent=11 // pred_check_branch
          %278 = sbr.rel (%p276) target = $region44
        $region43: #{tpu_custom_call.1} parent=11 // pred_region
          _
        $region44: #{tpu_custom_call.1} parent=11 // pred_fallthru
          _
      $region12: #{tpu_custom_call.1} parent=5 // pred_fallthru
        _
      %p279 = scmp.lt.s32.totalorder %s20, 2
      // Predicated region
      $region45: #{tpu_custom_call.1} parent=5 // pred_check
        %p280 = pneg %p279
      $region46: #{tpu_custom_call.1} parent=5 // pred_check_branch
        %282 = sbr.rel (%p280) target = $region48
      $region47: #{tpu_custom_call.1} parent=5 // pred_region
        // Predicated region
        $region49: #{tpu_custom_call.1} parent=47 // pred_check
          %p283 = pneg %p40
        $region50: #{tpu_custom_call.1} parent=47 // pred_check_branch
          %285 = sbr.rel (%p283) target = $region52
        $region51: #{tpu_custom_call.1} parent=47 // pred_region
          %s286 = smul.u32 4, %s20
          %p287 = scmp.lt.s32.totalorder %s286, 7
          %s288 = scalar_select %p287, %s286, 7
          %s289 = smul.addr %s288, 8
          %s290 = scalar_lea.vmem %s0, %s289
          %s291 = smul.u32 4, %s20
        $region52: #{tpu_custom_call.1} parent=47 // pred_fallthru
          _
      $region48: #{tpu_custom_call.1} parent=5 // pred_fallthru
        _
      %p292 = scmp.le.s32.totalorder 1, %s20
      %p293 = scmp.lt.s32.totalorder %s20, 3
      %p294 = pnand %p292, %p293
      %p295 = pneg %p294
      // Predicated region
      $region53: #{tpu_custom_call.1} parent=5 // pred_check
        _
      $region54: #{tpu_custom_call.1} parent=5 // pred_check_branch
        %297 = sbr.rel (%p294) target = $region56
      $region55: #{tpu_custom_call.1} parent=5 // pred_region
        %s298 = ssub.s32 %s20, 1
        %s299 = smul.u32 4, %s25
        %p300 = scmp.lt.s32.totalorder %s299, 7
        %s301 = scalar_select %p300, %s299, 7
        %s302 = smul.addr %s301, 8
        %s303 = scalar_lea.vmem %s0, %s302
        %p304 = pneg %p46
        %p305 = pneg %p43
        %p306 = pneg %p67
        %p307 = pneg %p64
        %p308 = pneg %p88
        %p309 = pneg %p85
        %p310 = pneg %p109
        %p311 = pneg %p106
        %p312 = pneg %p130
        %p313 = pneg %p127
        %p314 = pneg %p151
        %p315 = pneg %p148
        %p316 = pneg %p172
        %p317 = pneg %p169
        %p318 = pneg %p193
        %p319 = pneg %p190
        %p320 = pneg %p214
        %p321 = pneg %p211
        %p322 = pneg %p240
        %p323 = pneg %p237
        %s324 = sand.u32 %s227, 1
        %s325 = scalar_lea.sflag [#allocation4], %s324
        %s326 = sand.u32 %s227, 1
        %s327 = smul.addr %s326, 4
        %s328 = scalar_lea.vmem [#allocation3], %s327
        %s329 = smul.u32 4, %s25
        %p330 = scmp.lt.s32.totalorder %s329, 7
        %s331 = scalar_select %p330, %s329, 7
        %s332 = smul.addr %s331, 8
        %s333 = scalar_lea.vmem %s0, %s332
        %s334 = smul.u32 4, %s25
        %s335 = smul.u32 4, %s25
        %v336 = vld [vmem:[%s333] sm:$0xff]
        %v337 = vld [vmem:[%s333 + $0x8] sm:$0xff]
        %v338 = vld [vmem:[%s333 + $0x10] sm:$0xff]
        %v339 = vld [vmem:[%s333 + $0x18] sm:$0xff]
        %v340 = vld [vmem:[%s1] sm:$0xff]
        %v341 = vld [vmem:[%s1 + $0x8] sm:$0xff]
        %v342 = vld [vmem:[%s1 + $0x10] sm:$0xff]
        %v343 = vld [vmem:[%s1 + $0x18] sm:$0xff]
        %v344 = vld [vmem:[%s1 + $0x20] sm:$0xff]
        %v345 = vld [vmem:[%s1 + $0x28] sm:$0xff]
        %v346 = vld [vmem:[%s1 + $0x30] sm:$0xff]
        %v347 = vld [vmem:[%s1 + $0x38] sm:$0xff]
        %v348 = vld [vmem:[%s1 + $0x40] sm:$0xff]
        %v349 = vld [vmem:[%s1 + $0x48] sm:$0xff]
        %v350 = vld [vmem:[%s1 + $0x50] sm:$0xff]
        %v351 = vld [vmem:[%s1 + $0x58] sm:$0xff]
        %v352 = vld [vmem:[%s1 + $0x60] sm:$0xff]
        %v353 = vld [vmem:[%s1 + $0x68] sm:$0xff]
        %v354 = vld [vmem:[%s1 + $0x70] sm:$0xff]
        %v355 = vld [vmem:[%s1 + $0x78] sm:$0xff]
        %v356 = vld [vmem:[%s2] sm:$0xff]
        %v357 = vld [vmem:[%s2 + $0x8] sm:$0xff]
        %v358 = vld [vmem:[%s2 + $0x10] sm:$0xff]
        %v359 = vld [vmem:[%s2 + $0x18] sm:$0xff]
        %v360 = vld [vmem:[%s2 + $0x20] sm:$0xff]
        %v361 = vld [vmem:[%s2 + $0x28] sm:$0xff]
        %v362 = vld [vmem:[%s2 + $0x30] sm:$0xff]
        %v363 = vld [vmem:[%s2 + $0x38] sm:$0xff]
        %v364 = vld [vmem:[%s2 + $0x40] sm:$0xff]
        %v365 = vld [vmem:[%s2 + $0x48] sm:$0xff]
        %v366 = vld [vmem:[%s2 + $0x50] sm:$0xff]
        %v367 = vld [vmem:[%s2 + $0x58] sm:$0xff]
        %v368 = vld [vmem:[%s2 + $0x60] sm:$0xff]
        %v369 = vld [vmem:[%s2 + $0x68] sm:$0xff]
        %v370 = vld [vmem:[%s2 + $0x70] sm:$0xff]
        %v371 = vld [vmem:[%s2 + $0x78] sm:$0xff]
        %373 = vset.pattern.permute.xlu0 0
        %374 = vperm.xlu0 %373, %v356
        %v375 = vpop.permute.xlu0 %374
        %378 = vset.pattern.permute.xlu0 0
        %379 = vperm.xlu0 %378, %v357
        %v380 = vpop.permute.xlu0 %379
        %383 = vset.pattern.permute.xlu0 0
        %384 = vperm.xlu0 %383, %v358
        %v385 = vpop.permute.xlu0 %384
        %388 = vset.pattern.permute.xlu0 0
        %389 = vperm.xlu0 %388, %v359
        %v390 = vpop.permute.xlu0 %389
        %393 = vset.pattern.permute.xlu0 0
        %394 = vperm.xlu0 %393, %v360
        %v395 = vpop.permute.xlu0 %394
        %398 = vset.pattern.permute.xlu0 0
        %399 = vperm.xlu0 %398, %v361
        %v400 = vpop.permute.xlu0 %399
        %403 = vset.pattern.permute.xlu0 0
        %404 = vperm.xlu0 %403, %v362
        %v405 = vpop.permute.xlu0 %404
        %408 = vset.pattern.permute.xlu0 0
        %409 = vperm.xlu0 %408, %v363
        %v410 = vpop.permute.xlu0 %409
        %413 = vset.pattern.permute.xlu0 0
        %414 = vperm.xlu0 %413, %v364
        %v415 = vpop.permute.xlu0 %414
        %418 = vset.pattern.permute.xlu0 0
        %419 = vperm.xlu0 %418, %v365
        %v420 = vpop.permute.xlu0 %419
        %423 = vset.pattern.permute.xlu0 0
        %424 = vperm.xlu0 %423, %v366
        %v425 = vpop.permute.xlu0 %424
        %428 = vset.pattern.permute.xlu0 0
        %429 = vperm.xlu0 %428, %v367
        %v430 = vpop.permute.xlu0 %429
        %433 = vset.pattern.permute.xlu0 0
        %434 = vperm.xlu0 %433, %v368
        %v435 = vpop.permute.xlu0 %434
        %438 = vset.pattern.permute.xlu0 0
        %439 = vperm.xlu0 %438, %v369
        %v440 = vpop.permute.xlu0 %439
        %443 = vset.pattern.permute.xlu0 0
        %444 = vperm.xlu0 %443, %v370
        %v445 = vpop.permute.xlu0 %444
        %448 = vset.pattern.permute.xlu0 0
        %449 = vperm.xlu0 %448, %v371
        %v450 = vpop.permute.xlu0 %449
        %vm452 = vcmask 64512
        %v454 = vsel %vm452, %v340, 0
        %v457 = vsel %vm452, %v341, 0
        %v460 = vsel %vm452, %v342, 0
        %v463 = vsel %vm452, %v343, 0
        %v466 = vsel %vm452, %v344, 0
        %v469 = vsel %vm452, %v345, 0
        %v472 = vsel %vm452, %v346, 0
        %v475 = vsel %vm452, %v347, 0
        %v478 = vsel %vm452, %v348, 0
        %v481 = vsel %vm452, %v349, 0
        %v484 = vsel %vm452, %v350, 0
        %v487 = vsel %vm452, %v351, 0
        %v490 = vsel %vm452, %v352, 0
        %v493 = vsel %vm452, %v353, 0
        %v496 = vsel %vm452, %v354, 0
        %v499 = vsel %vm452, %v355, 0
        %501 = vmatprep.subr.mxu0 %v337
        %502 = vmatpush1.msra.mxu0 %v336
        %503 = vmatprep.subr.mxu0 0.0
        %504 = vmatpush1.msra.mxu0 0.0
        %505 = vmatprep.subr.mxu0 0.0
        %506 = vmatpush1.msra.mxu0 0.0
        %507 = vmatprep.subr.mxu0 0.0
        %508 = vmatpush1.msra.mxu0 0.0
        %509 = vmatprep.subr.mxu0 0.0
        %510 = vmatpush1.msra.mxu0 0.0
        %511 = vmatprep.subr.mxu0 0.0
        %512 = vmatpush1.msra.mxu0 0.0
        %513 = vmatprep.subr.mxu0 0.0
        %514 = vmatpush1.msra.mxu0 0.0
        %515 = vmatprep.subr.mxu0 0.0
        %516 = vmatpush1.msra.mxu0 0.0
        %517 = vmatprep.subr.mxu0 0.0
        %518 = vmatpush1.msra.mxu0 0.0
        %519 = vmatprep.subr.mxu0 0.0
        %520 = vmatpush1.msra.mxu0 0.0
        %521 = vmatprep.subr.mxu0 0.0
        %522 = vmatpush1.msra.mxu0 0.0
        %523 = vmatprep.subr.mxu0 0.0
        %524 = vmatpush1.msra.mxu0 0.0
        %525 = vmatprep.subr.mxu0 0.0
        %526 = vmatpush1.msra.mxu0 0.0
        %527 = vmatprep.subr.mxu0 0.0
        %528 = vmatpush1.msra.mxu0 0.0
        %529 = vmatprep.subr.mxu0 0.0
        %530 = vmatpush1.msra.mxu0 0.0
        %531 = vmatprep.subr.mxu0 0.0
        %532 = vmatpush1.msra.mxu0 0.0
        %533 = vmatprep.subr.mxu0 0.0
        %534 = vmatpush1.msra.mxu0 0.0
        %535 = vmatprep.subr.mxu0 0.0
        %536 = vmatpush1.msra.mxu0 0.0
        %537 = vmatprep.subr.mxu0 0.0
        %538 = vmatpush1.msra.mxu0 0.0
        %539 = vmatprep.subr.mxu0 0.0
        %540 = vmatpush1.msra.mxu0 0.0
        %541 = vmatprep.subr.mxu0 0.0
        %542 = vmatpush1.msra.mxu0 0.0
        %543 = vmatprep.subr.mxu0 0.0
        %544 = vmatpush1.msra.mxu0 0.0
        %545 = vmatprep.subr.mxu0 0.0
        %546 = vmatpush1.msra.mxu0 0.0
        %547 = vmatprep.subr.mxu0 0.0
        %548 = vmatpush1.msra.mxu0 0.0
        %549 = vmatprep.subr.mxu0 0.0
        %550 = vmatpush1.msra.mxu0 0.0
        %551 = vmatprep.subr.mxu0 0.0
        %552 = vmatpush1.msra.mxu0 0.0
        %553 = vmatprep.subr.mxu0 0.0
        %554 = vmatpush1.msra.mxu0 0.0
        %555 = vmatprep.subr.mxu0 0.0
        %556 = vmatpush1.msra.mxu0 0.0
        %557 = vmatprep.subr.mxu0 0.0
        %558 = vmatpush1.msra.mxu0 0.0
        %559 = vmatprep.subr.mxu0 0.0
        %560 = vmatpush1.msra.mxu0 0.0
        %561 = vmatprep.subr.mxu0 0.0
        %562 = vmatpush1.msra.mxu0 0.0
        %563 = vmatprep.subr.mxu0 0.0
        %564 = vmatpush1.msra.mxu0 0.0
        %565 = vmatprep.mubr.f32.mxu0 0.0
        %566 = vmatmul.mubr.f32.gmra.mrb[0].mxu0 %v454
        %v567 = vpop.f32.mrb[0].mxu0
        %v568 = vadd.f32 %v375, %v567
        %v569 = vpop.f32.mrb[0].mxu0
        %v570 = vadd.f32 %v375, %v569
        %571 = vmatprep.mubr.f32.mxu0 0.0
        %572 = vmatmul.mubr.f32.gmra.mrb[0].mxu0 %v457
        %v573 = vpop.f32.mrb[0].mxu0
        %v574 = vadd.f32 %v380, %v573
        %v575 = vpop.f32.mrb[0].mxu0
        %v576 = vadd.f32 %v380, %v575
        %577 = vmatprep.mubr.f32.mxu0 0.0
        %578 = vmatmul.mubr.f32.gmra.mrb[0].mxu0 %v460
        %v579 = vpop.f32.mrb[0].mxu0
        %v580 = vadd.f32 %v385, %v579
        %v581 = vpop.f32.mrb[0].mxu0
        %v582 = vadd.f32 %v385, %v581
        %583 = vmatprep.mubr.f32.mxu0 0.0
        %584 = vmatmul.mubr.f32.gmra.mrb[0].mxu0 %v463
        %v585 = vpop.f32.mrb[0].mxu0
        %v586 = vadd.f32 %v390, %v585
        %v587 = vpop.f32.mrb[0].mxu0
        %v588 = vadd.f32 %v390, %v587
        %589 = vmatprep.mubr.f32.mxu0 0.0
        %590 = vmatmul.mubr.f32.gmra.mrb[0].mxu0 %v466
        %v591 = vpop.f32.mrb[0].mxu0
        %v592 = vadd.f32 %v395, %v591
        %v593 = vpop.f32.mrb[0].mxu0
        %v594 = vadd.f32 %v395, %v593
        %595 = vmatprep.mubr.f32.mxu0 0.0
        %596 = vmatmul.mubr.f32.gmra.mrb[0].mxu0 %v469
        %v597 = vpop.f32.mrb[0].mxu0
        %v598 = vadd.f32 %v400, %v597
        %v599 = vpop.f32.mrb[0].mxu0
        %v600 = vadd.f32 %v400, %v599
        %601 = vmatprep.mubr.f32.mxu0 0.0
        %602 = vmatmul.mubr.f32.gmra.mrb[0].mxu0 %v472
        %v603 = vpop.f32.mrb[0].mxu0
        %v604 = vadd.f32 %v405, %v603
        %v605 = vpop.f32.mrb[0].mxu0
        %v606 = vadd.f32 %v405, %v605
        %607 = vmatprep.mubr.f32.mxu0 0.0
        %608 = vmatmul.mubr.f32.gmra.mrb[0].mxu0 %v475
        %v609 = vpop.f32.mrb[0].mxu0
        %v610 = vadd.f32 %v410, %v609
        %v611 = vpop.f32.mrb[0].mxu0
        %v612 = vadd.f32 %v410, %v611
        %613 = vmatprep.mubr.f32.mxu0 0.0
        %614 = vmatmul.mubr.f32.gmra.mrb[0].mxu0 %v478
        %v615 = vpop.f32.mrb[0].mxu0
        %v616 = vadd.f32 %v415, %v615
        %v617 = vpop.f32.mrb[0].mxu0
        %v618 = vadd.f32 %v415, %v617
        %619 = vmatprep.mubr.f32.mxu0 0.0
        %620 = vmatmul.mubr.f32.gmra.mrb[0].mxu0 %v481
        %v621 = vpop.f32.mrb[0].mxu0
        %v622 = vadd.f32 %v420, %v621
        %v623 = vpop.f32.mrb[0].mxu0
        %v624 = vadd.f32 %v420, %v623
        %625 = vmatprep.mubr.f32.mxu0 0.0
        %626 = vmatmul.mubr.f32.gmra.mrb[0].mxu0 %v484
        %v627 = vpop.f32.mrb[0].mxu0
        %v628 = vadd.f32 %v425, %v627
        %v629 = vpop.f32.mrb[0].mxu0
        %v630 = vadd.f32 %v425, %v629
        %631 = vmatprep.mubr.f32.mxu0 0.0
        %632 = vmatmul.mubr.f32.gmra.mrb[0].mxu0 %v487
        %v633 = vpop.f32.mrb[0].mxu0
        %v634 = vadd.f32 %v430, %v633
        %v635 = vpop.f32.mrb[0].mxu0
        %v636 = vadd.f32 %v430, %v635
        %637 = vmatprep.mubr.f32.mxu0 0.0
        %638 = vmatmul.mubr.f32.gmra.mrb[0].mxu0 %v490
        %v639 = vpop.f32.mrb[0].mxu0
        %v640 = vadd.f32 %v435, %v639
        %v641 = vpop.f32.mrb[0].mxu0
        %v642 = vadd.f32 %v435, %v641
        %643 = vmatprep.mubr.f32.mxu0 0.0
        %644 = vmatmul.mubr.f32.gmra.mrb[0].mxu0 %v493
        %v645 = vpop.f32.mrb[0].mxu0
        %v646 = vadd.f32 %v440, %v645
        %v647 = vpop.f32.mrb[0].mxu0
        %v648 = vadd.f32 %v440, %v647
        %649 = vmatprep.mubr.f32.mxu0 0.0
        %650 = vmatmul.mubr.f32.gmra.mrb[0].mxu0 %v496
        %v651 = vpop.f32.mrb[0].mxu0
        %v652 = vadd.f32 %v445, %v651
        %v653 = vpop.f32.mrb[0].mxu0
        %v654 = vadd.f32 %v445, %v653
        %655 = vmatprep.mubr.f32.mxu0 0.0
        %656 = vmatmul.mubr.f32.gmra.mrb[0].mxu0 %v499
        %v657 = vpop.f32.mrb[0].mxu0
        %v658 = vadd.f32 %v450, %v657
        %v659 = vpop.f32.mrb[0].mxu0
        %v660 = vadd.f32 %v450, %v659
        %661 = vdwg.mxu0
        %662 = vmatprep.subr.mxu0 %v339
        %663 = vmatpush1.msra.mxu0 %v338
        %664 = vmatprep.subr.mxu0 0.0
        %665 = vmatpush1.msra.mxu0 0.0
        %666 = vmatprep.subr.mxu0 0.0
        %667 = vmatpush1.msra.mxu0 0.0
        %668 = vmatprep.subr.mxu0 0.0
        %669 = vmatpush1.msra.mxu0 0.0
        %670 = vmatprep.subr.mxu0 0.0
        %671 = vmatpush1.msra.mxu0 0.0
        %672 = vmatprep.subr.mxu0 0.0
        %673 = vmatpush1.msra.mxu0 0.0
        %674 = vmatprep.subr.mxu0 0.0
        %675 = vmatpush1.msra.mxu0 0.0
        %676 = vmatprep.subr.mxu0 0.0
        %677 = vmatpush1.msra.mxu0 0.0
        %678 = vmatprep.subr.mxu0 0.0
        %679 = vmatpush1.msra.mxu0 0.0
        %680 = vmatprep.subr.mxu0 0.0
        %681 = vmatpush1.msra.mxu0 0.0
        %682 = vmatprep.subr.mxu0 0.0
        %683 = vmatpush1.msra.mxu0 0.0
        %684 = vmatprep.subr.mxu0 0.0
        %685 = vmatpush1.msra.mxu0 0.0
        %686 = vmatprep.subr.mxu0 0.0
        %687 = vmatpush1.msra.mxu0 0.0
        %688 = vmatprep.subr.mxu0 0.0
        %689 = vmatpush1.msra.mxu0 0.0
        %690 = vmatprep.subr.mxu0 0.0
        %691 = vmatpush1.msra.mxu0 0.0
        %692 = vmatprep.subr.mxu0 0.0
        %693 = vmatpush1.msra.mxu0 0.0
        %694 = vmatprep.subr.mxu0 0.0
        %695 = vmatpush1.msra.mxu0 0.0
        %696 = vmatprep.subr.mxu0 0.0
        %697 = vmatpush1.msra.mxu0 0.0
        %698 = vmatprep.subr.mxu0 0.0
        %699 = vmatpush1.msra.mxu0 0.0
        %700 = vmatprep.subr.mxu0 0.0
        %701 = vmatpush1.msra.mxu0 0.0
        %702 = vmatprep.subr.mxu0 0.0
        %703 = vmatpush1.msra.mxu0 0.0
        %704 = vmatprep.subr.mxu0 0.0
        %705 = vmatpush1.msra.mxu0 0.0
        %706 = vmatprep.subr.mxu0 0.0
        %707 = vmatpush1.msra.mxu0 0.0
        %708 = vmatprep.subr.mxu0 0.0
        %709 = vmatpush1.msra.mxu0 0.0
        %710 = vmatprep.subr.mxu0 0.0
        %711 = vmatpush1.msra.mxu0 0.0
        %712 = vmatprep.subr.mxu0 0.0
        %713 = vmatpush1.msra.mxu0 0.0
        %714 = vmatprep.subr.mxu0 0.0
        %715 = vmatpush1.msra.mxu0 0.0
        %716 = vmatprep.subr.mxu0 0.0
        %717 = vmatpush1.msra.mxu0 0.0
        %718 = vmatprep.subr.mxu0 0.0
        %719 = vmatpush1.msra.mxu0 0.0
        %720 = vmatprep.subr.mxu0 0.0
        %721 = vmatpush1.msra.mxu0 0.0
        %722 = vmatprep.subr.mxu0 0.0
        %723 = vmatpush1.msra.mxu0 0.0
        %724 = vmatprep.subr.mxu0 0.0
        %725 = vmatpush1.msra.mxu0 0.0
        %726 = vmatprep.mubr.f32.mxu0 0.0
        %727 = vmatmul.mubr.f32.gmra.mrb[0].mxu0 %v454
        %v728 = vpop.f32.mrb[0].mxu0
        %v729 = vadd.f32 %v375, %v728
        %v730 = vpop.f32.mrb[0].mxu0
        %v731 = vadd.f32 %v375, %v730
        %732 = vmatprep.mubr.f32.mxu0 0.0
        %733 = vmatmul.mubr.f32.gmra.mrb[0].mxu0 %v457
        %v734 = vpop.f32.mrb[0].mxu0
        %v735 = vadd.f32 %v380, %v734
        %v736 = vpop.f32.mrb[0].mxu0
        %v737 = vadd.f32 %v380, %v736
        %738 = vmatprep.mubr.f32.mxu0 0.0
        %739 = vmatmul.mubr.f32.gmra.mrb[0].mxu0 %v460
        %v740 = vpop.f32.mrb[0].mxu0
        %v741 = vadd.f32 %v385, %v740
        %v742 = vpop.f32.mrb[0].mxu0
        %v743 = vadd.f32 %v385, %v742
        %744 = vmatprep.mubr.f32.mxu0 0.0
        %745 = vmatmul.mubr.f32.gmra.mrb[0].mxu0 %v463
        %v746 = vpop.f32.mrb[0].mxu0
        %v747 = vadd.f32 %v390, %v746
        %v748 = vpop.f32.mrb[0].mxu0
        %v749 = vadd.f32 %v390, %v748
        %750 = vmatprep.mubr.f32.mxu0 0.0
        %751 = vmatmul.mubr.f32.gmra.mrb[0].mxu0 %v466
        %v752 = vpop.f32.mrb[0].mxu0
        %v753 = vadd.f32 %v395, %v752
        %v754 = vpop.f32.mrb[0].mxu0
        %v755 = vadd.f32 %v395, %v754
        %756 = vmatprep.mubr.f32.mxu0 0.0
        %757 = vmatmul.mubr.f32.gmra.mrb[0].mxu0 %v469
        %v758 = vpop.f32.mrb[0].mxu0
        %v759 = vadd.f32 %v400, %v758
        %v760 = vpop.f32.mrb[0].mxu0
        %v761 = vadd.f32 %v400, %v760
        %762 = vmatprep.mubr.f32.mxu0 0.0
        %763 = vmatmul.mubr.f32.gmra.mrb[0].mxu0 %v472
        %v764 = vpop.f32.mrb[0].mxu0
        %v765 = vadd.f32 %v405, %v764
        %v766 = vpop.f32.mrb[0].mxu0
        %v767 = vadd.f32 %v405, %v766
        %768 = vmatprep.mubr.f32.mxu0 0.0
        %769 = vmatmul.mubr.f32.gmra.mrb[0].mxu0 %v475
        %v770 = vpop.f32.mrb[0].mxu0
        %v771 = vadd.f32 %v410, %v770
        %v772 = vpop.f32.mrb[0].mxu0
        %v773 = vadd.f32 %v410, %v772
        %774 = vmatprep.mubr.f32.mxu0 0.0
        %775 = vmatmul.mubr.f32.gmra.mrb[0].mxu0 %v478
        %v776 = vpop.f32.mrb[0].mxu0
        %v777 = vadd.f32 %v415, %v776
        %v778 = vpop.f32.mrb[0].mxu0
        %v779 = vadd.f32 %v415, %v778
        %780 = vmatprep.mubr.f32.mxu0 0.0
        %781 = vmatmul.mubr.f32.gmra.mrb[0].mxu0 %v481
        %v782 = vpop.f32.mrb[0].mxu0
        %v783 = vadd.f32 %v420, %v782
        %v784 = vpop.f32.mrb[0].mxu0
        %v785 = vadd.f32 %v420, %v784
        %786 = vmatprep.mubr.f32.mxu0 0.0
        %787 = vmatmul.mubr.f32.gmra.mrb[0].mxu0 %v484
        %v788 = vpop.f32.mrb[0].mxu0
        %v789 = vadd.f32 %v425, %v788
        %v790 = vpop.f32.mrb[0].mxu0
        %v791 = vadd.f32 %v425, %v790
        %792 = vmatprep.mubr.f32.mxu0 0.0
        %793 = vmatmul.mubr.f32.gmra.mrb[0].mxu0 %v487
        %v794 = vpop.f32.mrb[0].mxu0
        %v795 = vadd.f32 %v430, %v794
        %v796 = vpop.f32.mrb[0].mxu0
        %v797 = vadd.f32 %v430, %v796
        %798 = vmatprep.mubr.f32.mxu0 0.0
        %799 = vmatmul.mubr.f32.gmra.mrb[0].mxu0 %v490
        %v800 = vpop.f32.mrb[0].mxu0
        %v801 = vadd.f32 %v435, %v800
        %v802 = vpop.f32.mrb[0].mxu0
        %v803 = vadd.f32 %v435, %v802
        %804 = vmatprep.mubr.f32.mxu0 0.0
        %805 = vmatmul.mubr.f32.gmra.mrb[0].mxu0 %v493
        %v806 = vpop.f32.mrb[0].mxu0
        %v807 = vadd.f32 %v440, %v806
        %v808 = vpop.f32.mrb[0].mxu0
        %v809 = vadd.f32 %v440, %v808
        %810 = vmatprep.mubr.f32.mxu0 0.0
        %811 = vmatmul.mubr.f32.gmra.mrb[0].mxu0 %v496
        %v812 = vpop.f32.mrb[0].mxu0
        %v813 = vadd.f32 %v445, %v812
        %v814 = vpop.f32.mrb[0].mxu0
        %v815 = vadd.f32 %v445, %v814
        %816 = vmatprep.mubr.f32.mxu0 0.0
        %817 = vmatmul.mubr.f32.gmra.mrb[0].mxu0 %v499
        %v818 = vpop.f32.mrb[0].mxu0
        %v819 = vadd.f32 %v450, %v818
        %v820 = vpop.f32.mrb[0].mxu0
        %v821 = vadd.f32 %v450, %v820
        %822 = vdwg.mxu0
        %v823 = vtanh.pop %v568
        %v824 = vtanh.pop %v570
        %v825 = vtanh.pop %v729
        %v826 = vtanh.pop %v731
        %v827 = vtanh.pop %v574
        %v828 = vtanh.pop %v576
        %v829 = vtanh.pop %v735
        %v830 = vtanh.pop %v737
        %v831 = vtanh.pop %v580
        %v832 = vtanh.pop %v582
        %v833 = vtanh.pop %v741
        %v834 = vtanh.pop %v743
        %v835 = vtanh.pop %v586
        %v836 = vtanh.pop %v588
        %v837 = vtanh.pop %v747
        %v838 = vtanh.pop %v749
        %v839 = vtanh.pop %v592
        %v840 = vtanh.pop %v594
        %v841 = vtanh.pop %v753
        %v842 = vtanh.pop %v755
        %v843 = vtanh.pop %v598
        %v844 = vtanh.pop %v600
        %v845 = vtanh.pop %v759
        %v846 = vtanh.pop %v761
        %v847 = vtanh.pop %v604
        %v848 = vtanh.pop %v606
        %v849 = vtanh.pop %v765
        %v850 = vtanh.pop %v767
        %v851 = vtanh.pop %v610
        %v852 = vtanh.pop %v612
        %v853 = vtanh.pop %v771
        %v854 = vtanh.pop %v773
        %v855 = vtanh.pop %v616
        %v856 = vtanh.pop %v618
        %v857 = vtanh.pop %v777
        %v858 = vtanh.pop %v779
        %v859 = vtanh.pop %v622
        %v860 = vtanh.pop %v624
        %v861 = vtanh.pop %v783
        %v862 = vtanh.pop %v785
        %v863 = vtanh.pop %v628
        %v864 = vtanh.pop %v630
        %v865 = vtanh.pop %v789
        %v866 = vtanh.pop %v791
        %v867 = vtanh.pop %v634
        %v868 = vtanh.pop %v636
        %v869 = vtanh.pop %v795
        %v870 = vtanh.pop %v797
        %v871 = vtanh.pop %v640
        %v872 = vtanh.pop %v642
        %v873 = vtanh.pop %v801
        %v874 = vtanh.pop %v803
        %v875 = vtanh.pop %v646
        %v876 = vtanh.pop %v648
        %v877 = vtanh.pop %v807
        %v878 = vtanh.pop %v809
        %v879 = vtanh.pop %v652
        %v880 = vtanh.pop %v654
        %v881 = vtanh.pop %v813
        %v882 = vtanh.pop %v815
        %v883 = vtanh.pop %v658
        %v884 = vtanh.pop %v660
        %v885 = vtanh.pop %v819
        %v886 = vtanh.pop %v821
        %v887 = vld [vmem:[%s3] sm:$0xff]
        %v888 = vld [vmem:[%s3 + $0x8] sm:$0xff]
        %v889 = vld [vmem:[%s3 + $0x10] sm:$0xff]
        %v890 = vld [vmem:[%s3 + $0x18] sm:$0xff]
        %v891 = vld [vmem:[%s3 + $0x20] sm:$0xff]
        %v892 = vld [vmem:[%s3 + $0x28] sm:$0xff]
        %v893 = vld [vmem:[%s3 + $0x30] sm:$0xff]
        %v894 = vld [vmem:[%s3 + $0x38] sm:$0xff]
        %v895 = vld [vmem:[%s4] sm:$0xff]
        %v896 = vld [vmem:[%s4 + $0x8] sm:$0xff]
        %v897 = vld [vmem:[%s4 + $0x10] sm:$0xff]
        %v898 = vld [vmem:[%s4 + $0x18] sm:$0xff]
        %v899 = vld [vmem:[%s4 + $0x20] sm:$0xff]
        %v900 = vld [vmem:[%s4 + $0x28] sm:$0xff]
        %v901 = vld [vmem:[%s4 + $0x30] sm:$0xff]
        %v902 = vld [vmem:[%s4 + $0x38] sm:$0xff]
        %904 = vset.pattern.permute.xlu0 0
        %905 = vperm.xlu0 %904, %v895
        %v906 = vpop.permute.xlu0 %905
        %909 = vset.pattern.permute.xlu0 0
        %910 = vperm.xlu0 %909, %v896
        %v911 = vpop.permute.xlu0 %910
        %914 = vset.pattern.permute.xlu0 0
        %915 = vperm.xlu0 %914, %v897
        %v916 = vpop.permute.xlu0 %915
        %919 = vset.pattern.permute.xlu0 0
        %920 = vperm.xlu0 %919, %v898
        %v921 = vpop.permute.xlu0 %920
        %924 = vset.pattern.permute.xlu0 0
        %925 = vperm.xlu0 %924, %v899
        %v926 = vpop.permute.xlu0 %925
        %929 = vset.pattern.permute.xlu0 0
        %930 = vperm.xlu0 %929, %v900
        %v931 = vpop.permute.xlu0 %930
        %934 = vset.pattern.permute.xlu0 0
        %935 = vperm.xlu0 %934, %v901
        %v936 = vpop.permute.xlu0 %935
        %939 = vset.pattern.permute.xlu0 0
        %940 = vperm.xlu0 %939, %v902
        %v941 = vpop.permute.xlu0 %940
        %943 = vmatprep.subr.mxu0 %v824
        %944 = vmatpush1.msra.mxu0 %v823
        %945 = vmatprep.subr.mxu0 %v828
        %946 = vmatpush1.msra.mxu0 %v827
        %947 = vmatprep.subr.mxu0 %v832
        %948 = vmatpush1.msra.mxu0 %v831
        %949 = vmatprep.subr.mxu0 %v836
        %950 = vmatpush1.msra.mxu0 %v835
        %951 = vmatprep.subr.mxu0 %v840
        %952 = vmatpush1.msra.mxu0 %v839
        %953 = vmatprep.subr.mxu0 %v844
        %954 = vmatpush1.msra.mxu0 %v843
        %955 = vmatprep.subr.mxu0 %v848
        %956 = vmatpush1.msra.mxu0 %v847
        %957 = vmatprep.subr.mxu0 %v852
        %958 = vmatpush1.msra.mxu0 %v851
        %959 = vmatprep.subr.mxu0 %v856
        %960 = vmatpush1.msra.mxu0 %v855
        %961 = vmatprep.subr.mxu0 %v860
        %962 = vmatpush1.msra.mxu0 %v859
        %963 = vmatprep.subr.mxu0 %v864
        %964 = vmatpush1.msra.mxu0 %v863
        %965 = vmatprep.subr.mxu0 %v868
        %966 = vmatpush1.msra.mxu0 %v867
        %967 = vmatprep.subr.mxu0 %v872
        %968 = vmatpush1.msra.mxu0 %v871
        %969 = vmatprep.subr.mxu0 %v876
        %970 = vmatpush1.msra.mxu0 %v875
        %971 = vmatprep.subr.mxu0 %v880
        %972 = vmatpush1.msra.mxu0 %v879
        %973 = vmatprep.subr.mxu0 %v884
        %974 = vmatpush1.msra.mxu0 %v883
        %975 = vmatprep.subr.mxu0 0.0
        %976 = vmatpush1.msra.mxu0 0.0
        %977 = vmatprep.subr.mxu0 0.0
        %978 = vmatpush1.msra.mxu0 0.0
        %979 = vmatprep.subr.mxu0 0.0
        %980 = vmatpush1.msra.mxu0 0.0
        %981 = vmatprep.subr.mxu0 0.0
        %982 = vmatpush1.msra.mxu0 0.0
        %983 = vmatprep.subr.mxu0 0.0
        %984 = vmatpush1.msra.mxu0 0.0
        %985 = vmatprep.subr.mxu0 0.0
        %986 = vmatpush1.msra.mxu0 0.0
        %987 = vmatprep.subr.mxu0 0.0
        %988 = vmatpush1.msra.mxu0 0.0
        %989 = vmatprep.subr.mxu0 0.0
        %990 = vmatpush1.msra.mxu0 0.0
        %991 = vmatprep.subr.mxu0 0.0
        %992 = vmatpush1.msra.mxu0 0.0
        %993 = vmatprep.subr.mxu0 0.0
        %994 = vmatpush1.msra.mxu0 0.0
        %995 = vmatprep.subr.mxu0 0.0
        %996 = vmatpush1.msra.mxu0 0.0
        %997 = vmatprep.subr.mxu0 0.0
        %998 = vmatpush1.msra.mxu0 0.0
        %999 = vmatprep.subr.mxu0 0.0
        %1000 = vmatpush1.msra.mxu0 0.0
        %1001 = vmatprep.subr.mxu0 0.0
        %1002 = vmatpush1.msra.mxu0 0.0
        %1003 = vmatprep.subr.mxu0 0.0
        %1004 = vmatpush1.msra.mxu0 0.0
        %1005 = vmatprep.subr.mxu0 0.0
        %1006 = vmatpush1.msra.mxu0 0.0
        %1007 = vmatprep.mubr.f32.mxu0 0.0
        %1008 = vmatmul.mubr.f32.gmra.mrb[0].mxu0 %v887
        %v1009 = vpop.f32.mrb[0].mxu0
        %v1010 = vadd.f32 %v906, %v1009
        %v1011 = vpop.f32.mrb[0].mxu0
        %v1012 = vadd.f32 %v906, %v1011
        %1013 = vmatprep.mubr.f32.mxu0 0.0
        %1014 = vmatmul.mubr.f32.gmra.mrb[0].mxu0 %v888
        %v1015 = vpop.f32.mrb[0].mxu0
        %v1016 = vadd.f32 %v911, %v1015
        %v1017 = vpop.f32.mrb[0].mxu0
        %v1018 = vadd.f32 %v911, %v1017
        %1019 = vmatprep.mubr.f32.mxu0 0.0
        %1020 = vmatmul.mubr.f32.gmra.mrb[0].mxu0 %v889
        %v1021 = vpop.f32.mrb[0].mxu0
        %v1022 = vadd.f32 %v916, %v1021
        %v1023 = vpop.f32.mrb[0].mxu0
        %v1024 = vadd.f32 %v916, %v1023
        %1025 = vmatprep.mubr.f32.mxu0 0.0
        %1026 = vmatmul.mubr.f32.gmra.mrb[0].mxu0 %v890
        %v1027 = vpop.f32.mrb[0].mxu0
        %v1028 = vadd.f32 %v921, %v1027
        %v1029 = vpop.f32.mrb[0].mxu0
        %v1030 = vadd.f32 %v921, %v1029
        %1031 = vmatprep.mubr.f32.mxu0 0.0
        %1032 = vmatmul.mubr.f32.gmra.mrb[0].mxu0 %v891
        %v1033 = vpop.f32.mrb[0].mxu0
        %v1034 = vadd.f32 %v926, %v1033
        %v1035 = vpop.f32.mrb[0].mxu0
        %v1036 = vadd.f32 %v926, %v1035
        %1037 = vmatprep.mubr.f32.mxu0 0.0
        %1038 = vmatmul.mubr.f32.gmra.mrb[0].mxu0 %v892
        %v1039 = vpop.f32.mrb[0].mxu0
        %v1040 = vadd.f32 %v931, %v1039
        %v1041 = vpop.f32.mrb[0].mxu0
        %v1042 = vadd.f32 %v931, %v1041
        %1043 = vmatprep.mubr.f32.mxu0 0.0
        %1044 = vmatmul.mubr.f32.gmra.mrb[0].mxu0 %v893
        %v1045 = vpop.f32.mrb[0].mxu0
        %v1046 = vadd.f32 %v936, %v1045
        %v1047 = vpop.f32.mrb[0].mxu0
        %v1048 = vadd.f32 %v936, %v1047
        %1049 = vmatprep.mubr.f32.mxu0 0.0
        %1050 = vmatmul.mubr.f32.gmra.mrb[0].mxu0 %v894
        %v1051 = vpop.f32.mrb[0].mxu0
        %v1052 = vadd.f32 %v941, %v1051
        %v1053 = vpop.f32.mrb[0].mxu0
        %v1054 = vadd.f32 %v941, %v1053
        %1055 = vdwg.mxu0
        %1056 = vmatprep.subr.mxu0 %v826
        %1057 = vmatpush1.msra.mxu0 %v825
        %1058 = vmatprep.subr.mxu0 %v830
        %1059 = vmatpush1.msra.mxu0 %v829
        %1060 = vmatprep.subr.mxu0 %v834
        %1061 = vmatpush1.msra.mxu0 %v833
        %1062 = vmatprep.subr.mxu0 %v838
        %1063 = vmatpush1.msra.mxu0 %v837
        %1064 = vmatprep.subr.mxu0 %v842
        %1065 = vmatpush1.msra.mxu0 %v841
        %1066 = vmatprep.subr.mxu0 %v846
        %1067 = vmatpush1.msra.mxu0 %v845
        %1068 = vmatprep.subr.mxu0 %v850
        %1069 = vmatpush1.msra.mxu0 %v849
        %1070 = vmatprep.subr.mxu0 %v854
        %1071 = vmatpush1.msra.mxu0 %v853
        %1072 = vmatprep.subr.mxu0 %v858
        %1073 = vmatpush1.msra.mxu0 %v857
        %1074 = vmatprep.subr.mxu0 %v862
        %1075 = vmatpush1.msra.mxu0 %v861
        %1076 = vmatprep.subr.mxu0 %v866
        %1077 = vmatpush1.msra.mxu0 %v865
        %1078 = vmatprep.subr.mxu0 %v870
        %1079 = vmatpush1.msra.mxu0 %v869
        %1080 = vmatprep.subr.mxu0 %v874
        %1081 = vmatpush1.msra.mxu0 %v873
        %1082 = vmatprep.subr.mxu0 %v878
        %1083 = vmatpush1.msra.mxu0 %v877
        %1084 = vmatprep.subr.mxu0 %v882
        %1085 = vmatpush1.msra.mxu0 %v881
        %1086 = vmatprep.subr.mxu0 %v886
        %1087 = vmatpush1.msra.mxu0 %v885
        %1088 = vmatprep.subr.mxu0 0.0
        %1089 = vmatpush1.msra.mxu0 0.0
        %1090 = vmatprep.subr.mxu0 0.0
        %1091 = vmatpush1.msra.mxu0 0.0
        %1092 = vmatprep.subr.mxu0 0.0
        %1093 = vmatpush1.msra.mxu0 0.0
        %1094 = vmatprep.subr.mxu0 0.0
        %1095 = vmatpush1.msra.mxu0 0.0
        %1096 = vmatprep.subr.mxu0 0.0
        %1097 = vmatpush1.msra.mxu0 0.0
        %1098 = vmatprep.subr.mxu0 0.0
        %1099 = vmatpush1.msra.mxu0 0.0
        %1100 = vmatprep.subr.mxu0 0.0
        %1101 = vmatpush1.msra.mxu0 0.0
        %1102 = vmatprep.subr.mxu0 0.0
        %1103 = vmatpush1.msra.mxu0 0.0
        %1104 = vmatprep.subr.mxu0 0.0
        %1105 = vmatpush1.msra.mxu0 0.0
        %1106 = vmatprep.subr.mxu0 0.0
        %1107 = vmatpush1.msra.mxu0 0.0
        %1108 = vmatprep.subr.mxu0 0.0
        %1109 = vmatpush1.msra.mxu0 0.0
        %1110 = vmatprep.subr.mxu0 0.0
        %1111 = vmatpush1.msra.mxu0 0.0
        %1112 = vmatprep.subr.mxu0 0.0
        %1113 = vmatpush1.msra.mxu0 0.0
        %1114 = vmatprep.subr.mxu0 0.0
        %1115 = vmatpush1.msra.mxu0 0.0
        %1116 = vmatprep.subr.mxu0 0.0
        %1117 = vmatpush1.msra.mxu0 0.0
        %1118 = vmatprep.subr.mxu0 0.0
        %1119 = vmatpush1.msra.mxu0 0.0
        %1120 = vmatprep.mubr.f32.mxu0 0.0
        %1121 = vmatmul.mubr.f32.gmra.mrb[0].mxu0 %v887
        %v1122 = vpop.f32.mrb[0].mxu0
        %v1123 = vadd.f32 %v906, %v1122
        %v1124 = vpop.f32.mrb[0].mxu0
        %v1125 = vadd.f32 %v906, %v1124
        %1126 = vmatprep.mubr.f32.mxu0 0.0
        %1127 = vmatmul.mubr.f32.gmra.mrb[0].mxu0 %v888
        %v1128 = vpop.f32.mrb[0].mxu0
        %v1129 = vadd.f32 %v911, %v1128
        %v1130 = vpop.f32.mrb[0].mxu0
        %v1131 = vadd.f32 %v911, %v1130
        %1132 = vmatprep.mubr.f32.mxu0 0.0
        %1133 = vmatmul.mubr.f32.gmra.mrb[0].mxu0 %v889
        %v1134 = vpop.f32.mrb[0].mxu0
        %v1135 = vadd.f32 %v916, %v1134
        %v1136 = vpop.f32.mrb[0].mxu0
        %v1137 = vadd.f32 %v916, %v1136
        %1138 = vmatprep.mubr.f32.mxu0 0.0
        %1139 = vmatmul.mubr.f32.gmra.mrb[0].mxu0 %v890
        %v1140 = vpop.f32.mrb[0].mxu0
        %v1141 = vadd.f32 %v921, %v1140
        %v1142 = vpop.f32.mrb[0].mxu0
        %v1143 = vadd.f32 %v921, %v1142
        %1144 = vmatprep.mubr.f32.mxu0 0.0
        %1145 = vmatmul.mubr.f32.gmra.mrb[0].mxu0 %v891
        %v1146 = vpop.f32.mrb[0].mxu0
        %v1147 = vadd.f32 %v926, %v1146
        %v1148 = vpop.f32.mrb[0].mxu0
        %v1149 = vadd.f32 %v926, %v1148
        %1150 = vmatprep.mubr.f32.mxu0 0.0
        %1151 = vmatmul.mubr.f32.gmra.mrb[0].mxu0 %v892
        %v1152 = vpop.f32.mrb[0].mxu0
        %v1153 = vadd.f32 %v931, %v1152
        %v1154 = vpop.f32.mrb[0].mxu0
        %v1155 = vadd.f32 %v931, %v1154
        %1156 = vmatprep.mubr.f32.mxu0 0.0
        %1157 = vmatmul.mubr.f32.gmra.mrb[0].mxu0 %v893
        %v1158 = vpop.f32.mrb[0].mxu0
        %v1159 = vadd.f32 %v936, %v1158
        %v1160 = vpop.f32.mrb[0].mxu0
        %v1161 = vadd.f32 %v936, %v1160
        %1162 = vmatprep.mubr.f32.mxu0 0.0
        %1163 = vmatmul.mubr.f32.gmra.mrb[0].mxu0 %v894
        %v1164 = vpop.f32.mrb[0].mxu0
        %v1165 = vadd.f32 %v941, %v1164
        %v1166 = vpop.f32.mrb[0].mxu0
        %v1167 = vadd.f32 %v941, %v1166
        %1168 = vdwg.mxu0
        %v1169 = vtanh.pop %v1010
        %v1170 = vtanh.pop %v1012
        %v1171 = vtanh.pop %v1123
        %v1172 = vtanh.pop %v1125
        %v1173 = vtanh.pop %v1016
        %v1174 = vtanh.pop %v1018
        %v1175 = vtanh.pop %v1129
        %v1176 = vtanh.pop %v1131
        %v1177 = vtanh.pop %v1022
        %v1178 = vtanh.pop %v1024
        %v1179 = vtanh.pop %v1135
        %v1180 = vtanh.pop %v1137
        %v1181 = vtanh.pop %v1028
        %v1182 = vtanh.pop %v1030
        %v1183 = vtanh.pop %v1141
        %v1184 = vtanh.pop %v1143
        %v1185 = vtanh.pop %v1034
        %v1186 = vtanh.pop %v1036
        %v1187 = vtanh.pop %v1147
        %v1188 = vtanh.pop %v1149
        %v1189 = vtanh.pop %v1040
        %v1190 = vtanh.pop %v1042
        %v1191 = vtanh.pop %v1153
        %v1192 = vtanh.pop %v1155
        %v1193 = vtanh.pop %v1046
        %v1194 = vtanh.pop %v1048
        %v1195 = vtanh.pop %v1159
        %v1196 = vtanh.pop %v1161
        %v1197 = vtanh.pop %v1052
        %v1198 = vtanh.pop %v1054
        %v1199 = vtanh.pop %v1165
        %v1200 = vtanh.pop %v1167
        %v1201 = vld [vmem:[%s5] sm:$0xff]
        %v1202 = vld [vmem:[%s5 + $0x8] sm:$0xff]
        %v1203 = vld [vmem:[%s6] sm:$0xff]
        %v1204 = vld [vmem:[%s6 + $0x8] sm:$0xff]
        %1206 = vset.pattern.permute.xlu0 0
        %1207 = vperm.xlu0 %1206, %v1203
        %v1208 = vpop.permute.xlu0 %1207
        %1211 = vset.pattern.permute.xlu0 0
        %1212 = vperm.xlu0 %1211, %v1204
        %v1213 = vpop.permute.xlu0 %1212
        %vm1215 = vcmask 523264
        %v1217 = vsel %vm1215, %v1201, 0
        %v1220 = vsel %vm1215, %v1202, 0
        %1222 = vmatprep.subr.mxu0 %v1170
        %1223 = vmatpush1.msra.mxu0 %v1169
        %1224 = vmatprep.subr.mxu0 %v1174
        %1225 = vmatpush1.msra.mxu0 %v1173
        %1226 = vmatprep.subr.mxu0 %v1178
        %1227 = vmatpush1.msra.mxu0 %v1177
        %1228 = vmatprep.subr.mxu0 %v1182
        %1229 = vmatpush1.msra.mxu0 %v1181
        %1230 = vmatprep.subr.mxu0 %v1186
        %1231 = vmatpush1.msra.mxu0 %v1185
        %1232 = vmatprep.subr.mxu0 %v1190
        %1233 = vmatpush1.msra.mxu0 %v1189
        %1234 = vmatprep.subr.mxu0 %v1194
        %1235 = vmatpush1.msra.mxu0 %v1193
        %1236 = vmatprep.subr.mxu0 %v1198
        %1237 = vmatpush1.msra.mxu0 %v1197
        %1238 = vmatprep.subr.mxu0 0.0
        %1239 = vmatpush1.msra.mxu0 0.0
        %1240 = vmatprep.subr.mxu0 0.0
        %1241 = vmatpush1.msra.mxu0 0.0
        %1242 = vmatprep.subr.mxu0 0.0
        %1243 = vmatpush1.msra.mxu0 0.0
        %1244 = vmatprep.subr.mxu0 0.0
        %1245 = vmatpush1.msra.mxu0 0.0
        %1246 = vmatprep.subr.mxu0 0.0
        %1247 = vmatpush1.msra.mxu0 0.0
        %1248 = vmatprep.subr.mxu0 0.0
        %1249 = vmatpush1.msra.mxu0 0.0
        %1250 = vmatprep.subr.mxu0 0.0
        %1251 = vmatpush1.msra.mxu0 0.0
        %1252 = vmatprep.subr.mxu0 0.0
        %1253 = vmatpush1.msra.mxu0 0.0
        %1254 = vmatprep.subr.mxu0 0.0
        %1255 = vmatpush1.msra.mxu0 0.0
        %1256 = vmatprep.subr.mxu0 0.0
        %1257 = vmatpush1.msra.mxu0 0.0
        %1258 = vmatprep.subr.mxu0 0.0
        %1259 = vmatpush1.msra.mxu0 0.0
        %1260 = vmatprep.subr.mxu0 0.0
        %1261 = vmatpush1.msra.mxu0 0.0
        %1262 = vmatprep.subr.mxu0 0.0
        %1263 = vmatpush1.msra.mxu0 0.0
        %1264 = vmatprep.subr.mxu0 0.0
        %1265 = vmatpush1.msra.mxu0 0.0
        %1266 = vmatprep.subr.mxu0 0.0
        %1267 = vmatpush1.msra.mxu0 0.0
        %1268 = vmatprep.subr.mxu0 0.0
        %1269 = vmatpush1.msra.mxu0 0.0
        %1270 = vmatprep.subr.mxu0 0.0
        %1271 = vmatpush1.msra.mxu0 0.0
        %1272 = vmatprep.subr.mxu0 0.0
        %1273 = vmatpush1.msra.mxu0 0.0
        %1274 = vmatprep.subr.mxu0 0.0
        %1275 = vmatpush1.msra.mxu0 0.0
        %1276 = vmatprep.subr.mxu0 0.0
        %1277 = vmatpush1.msra.mxu0 0.0
        %1278 = vmatprep.subr.mxu0 0.0
        %1279 = vmatpush1.msra.mxu0 0.0
        %1280 = vmatprep.subr.mxu0 0.0
        %1281 = vmatpush1.msra.mxu0 0.0
        %1282 = vmatprep.subr.mxu0 0.0
        %1283 = vmatpush1.msra.mxu0 0.0
        %1284 = vmatprep.subr.mxu0 0.0
        %1285 = vmatpush1.msra.mxu0 0.0
        %1286 = vmatprep.mubr.f32.mxu0 0.0
        %1287 = vmatmul.mubr.f32.gmra.mrb[0].mxu0 %v1217
        %v1288 = vpop.f32.mrb[0].mxu0
        %v1289 = vadd.f32 %v1208, %v1288
        %v1290 = vpop.f32.mrb[0].mxu0
        %v1291 = vadd.f32 %v1208, %v1290
        %1292 = vmatprep.mubr.f32.mxu0 0.0
        %1293 = vmatmul.mubr.f32.gmra.mrb[0].mxu0 %v1220
        %v1294 = vpop.f32.mrb[0].mxu0
        %v1295 = vadd.f32 %v1213, %v1294
        %v1296 = vpop.f32.mrb[0].mxu0
        %v1297 = vadd.f32 %v1213, %v1296
        %1298 = vdwg.mxu0
        %1299 = vmatprep.subr.mxu0 %v1172
        %1300 = vmatpush1.msra.mxu0 %v1171
        %1301 = vmatprep.subr.mxu0 %v1176
        %1302 = vmatpush1.msra.mxu0 %v1175
        %1303 = vmatprep.subr.mxu0 %v1180
        %1304 = vmatpush1.msra.mxu0 %v1179
        %1305 = vmatprep.subr.mxu0 %v1184
        %1306 = vmatpush1.msra.mxu0 %v1183
        %1307 = vmatprep.subr.mxu0 %v1188
        %1308 = vmatpush1.msra.mxu0 %v1187
        %1309 = vmatprep.subr.mxu0 %v1192
        %1310 = vmatpush1.msra.mxu0 %v1191
        %1311 = vmatprep.subr.mxu0 %v1196
        %1312 = vmatpush1.msra.mxu0 %v1195
        %1313 = vmatprep.subr.mxu0 %v1200
        %1314 = vmatpush1.msra.mxu0 %v1199
        %1315 = vmatprep.subr.mxu0 0.0
        %1316 = vmatpush1.msra.mxu0 0.0
        %1317 = vmatprep.subr.mxu0 0.0
        %1318 = vmatpush1.msra.mxu0 0.0
        %1319 = vmatprep.subr.mxu0 0.0
        %1320 = vmatpush1.msra.mxu0 0.0
        %1321 = vmatprep.subr.mxu0 0.0
        %1322 = vmatpush1.msra.mxu0 0.0
        %1323 = vmatprep.subr.mxu0 0.0
        %1324 = vmatpush1.msra.mxu0 0.0
        %1325 = vmatprep.subr.mxu0 0.0
        %1326 = vmatpush1.msra.mxu0 0.0
        %1327 = vmatprep.subr.mxu0 0.0
        %1328 = vmatpush1.msra.mxu0 0.0
        %1329 = vmatprep.subr.mxu0 0.0
        %1330 = vmatpush1.msra.mxu0 0.0
        %1331 = vmatprep.subr.mxu0 0.0
        %1332 = vmatpush1.msra.mxu0 0.0
        %1333 = vmatprep.subr.mxu0 0.0
        %1334 = vmatpush1.msra.mxu0 0.0
        %1335 = vmatprep.subr.mxu0 0.0
        %1336 = vmatpush1.msra.mxu0 0.0
        %1337 = vmatprep.subr.mxu0 0.0
        %1338 = vmatpush1.msra.mxu0 0.0
        %1339 = vmatprep.subr.mxu0 0.0
        %1340 = vmatpush1.msra.mxu0 0.0
        %1341 = vmatprep.subr.mxu0 0.0
        %1342 = vmatpush1.msra.mxu0 0.0
        %1343 = vmatprep.subr.mxu0 0.0
        %1344 = vmatpush1.msra.mxu0 0.0
        %1345 = vmatprep.subr.mxu0 0.0
        %1346 = vmatpush1.msra.mxu0 0.0
        %1347 = vmatprep.subr.mxu0 0.0
        %1348 = vmatpush1.msra.mxu0 0.0
        %1349 = vmatprep.subr.mxu0 0.0
        %1350 = vmatpush1.msra.mxu0 0.0
        %1351 = vmatprep.subr.mxu0 0.0
        %1352 = vmatpush1.msra.mxu0 0.0
        %1353 = vmatprep.subr.mxu0 0.0
        %1354 = vmatpush1.msra.mxu0 0.0
        %1355 = vmatprep.subr.mxu0 0.0
        %1356 = vmatpush1.msra.mxu0 0.0
        %1357 = vmatprep.subr.mxu0 0.0
        %1358 = vmatpush1.msra.mxu0 0.0
        %1359 = vmatprep.subr.mxu0 0.0
        %1360 = vmatpush1.msra.mxu0 0.0
        %1361 = vmatprep.subr.mxu0 0.0
        %1362 = vmatpush1.msra.mxu0 0.0
        %1363 = vmatprep.mubr.f32.mxu0 0.0
        %1364 = vmatmul.mubr.f32.gmra.mrb[0].mxu0 %v1217
        %v1365 = vpop.f32.mrb[0].mxu0
        %v1366 = vadd.f32 %v1208, %v1365
        %v1367 = vpop.f32.mrb[0].mxu0
        %v1368 = vadd.f32 %v1208, %v1367
        %1369 = vmatprep.mubr.f32.mxu0 0.0
        %1370 = vmatmul.mubr.f32.gmra.mrb[0].mxu0 %v1220
        %v1371 = vpop.f32.mrb[0].mxu0
        %v1372 = vadd.f32 %v1213, %v1371
        %v1373 = vpop.f32.mrb[0].mxu0
        %v1374 = vadd.f32 %v1213, %v1373
        %1375 = vdwg.mxu0
        %v1376 = vtanh.pop %v1289
        %v1377 = vtanh.pop %v1291
        %v1378 = vtanh.pop %v1366
        %v1379 = vtanh.pop %v1368
        %v1380 = vtanh.pop %v1295
        %v1381 = vtanh.pop %v1297
        %v1382 = vtanh.pop %v1372
        %v1383 = vtanh.pop %v1374
        %v1384 = vld [vmem:[%s7] sm:$0x1]
        %v1385 = vld [vmem:[#allocation2] sm:$0x1]
        %1387 = vset.pattern.permute.xlu0 0
        %1388 = vperm.xlu0 %1387, %v1385
        %v1389 = vpop.permute.xlu0 %1388
        %v1391 = vlaneseq
        %v1392 = vshrl.u32 %v1391, 7
        %v1393 = vsub.s32 0, %v1392
        %v1394 = vrot.slane %v1389, %v1393
        %vm1395 = vcmask 130048
        %v1397 = vsel %vm1395, %v1384, 0
        %1399 = vmatprep.subr.mxu0 %v1377
        %1400 = vmatpush1.msra.mxu0 %v1376
        %1401 = vmatprep.subr.mxu0 %v1381
        %1402 = vmatpush1.msra.mxu0 %v1380
        %1403 = vmatprep.subr.mxu0 0.0
        %1404 = vmatpush1.msra.mxu0 0.0
        %1405 = vmatprep.subr.mxu0 0.0
        %1406 = vmatpush1.msra.mxu0 0.0
        %1407 = vmatprep.subr.mxu0 0.0
        %1408 = vmatpush1.msra.mxu0 0.0
        %1409 = vmatprep.subr.mxu0 0.0
        %1410 = vmatpush1.msra.mxu0 0.0
        %1411 = vmatprep.subr.mxu0 0.0
        %1412 = vmatpush1.msra.mxu0 0.0
        %1413 = vmatprep.subr.mxu0 0.0
        %1414 = vmatpush1.msra.mxu0 0.0
        %1415 = vmatprep.subr.mxu0 0.0
        %1416 = vmatpush1.msra.mxu0 0.0
        %1417 = vmatprep.subr.mxu0 0.0
        %1418 = vmatpush1.msra.mxu0 0.0
        %1419 = vmatprep.subr.mxu0 0.0
        %1420 = vmatpush1.msra.mxu0 0.0
        %1421 = vmatprep.subr.mxu0 0.0
        %1422 = vmatpush1.msra.mxu0 0.0
        %1423 = vmatprep.subr.mxu0 0.0
        %1424 = vmatpush1.msra.mxu0 0.0
        %1425 = vmatprep.subr.mxu0 0.0
        %1426 = vmatpush1.msra.mxu0 0.0
        %1427 = vmatprep.subr.mxu0 0.0
        %1428 = vmatpush1.msra.mxu0 0.0
        %1429 = vmatprep.subr.mxu0 0.0
        %1430 = vmatpush1.msra.mxu0 0.0
        %1431 = vmatprep.subr.mxu0 0.0
        %1432 = vmatpush1.msra.mxu0 0.0
        %1433 = vmatprep.subr.mxu0 0.0
        %1434 = vmatpush1.msra.mxu0 0.0
        %1435 = vmatprep.subr.mxu0 0.0
        %1436 = vmatpush1.msra.mxu0 0.0
        %1437 = vmatprep.subr.mxu0 0.0
        %1438 = vmatpush1.msra.mxu0 0.0
        %1439 = vmatprep.subr.mxu0 0.0
        %1440 = vmatpush1.msra.mxu0 0.0
        %1441 = vmatprep.subr.mxu0 0.0
        %1442 = vmatpush1.msra.mxu0 0.0
        %1443 = vmatprep.subr.mxu0 0.0
        %1444 = vmatpush1.msra.mxu0 0.0
        %1445 = vmatprep.subr.mxu0 0.0
        %1446 = vmatpush1.msra.mxu0 0.0
        %1447 = vmatprep.subr.mxu0 0.0
        %1448 = vmatpush1.msra.mxu0 0.0
        %1449 = vmatprep.subr.mxu0 0.0
        %1450 = vmatpush1.msra.mxu0 0.0
        %1451 = vmatprep.subr.mxu0 0.0
        %1452 = vmatpush1.msra.mxu0 0.0
        %1453 = vmatprep.subr.mxu0 0.0
        %1454 = vmatpush1.msra.mxu0 0.0
        %1455 = vmatprep.subr.mxu0 0.0
        %1456 = vmatpush1.msra.mxu0 0.0
        %1457 = vmatprep.subr.mxu0 0.0
        %1458 = vmatpush1.msra.mxu0 0.0
        %1459 = vmatprep.subr.mxu0 0.0
        %1460 = vmatpush1.msra.mxu0 0.0
        %1461 = vmatprep.subr.mxu0 0.0
        %1462 = vmatpush1.msra.mxu0 0.0
        %1463 = vmatprep.mubr.f32.mxu0 0.0
        %1464 = vmatmul.mubr.f32.gmra.mrb[0].mxu0 %v1397
        %v1465 = vpop.f32.mrb[0].mxu0
        %v1466 = vadd.f32 %v1394, %v1465
        %v1467 = vpop.f32.mrb[0].mxu0
        %v1468 = vadd.f32 %v1394, %v1467
        %1469 = vdwg.mxu0
        %1470 = vmatprep.subr.mxu0 %v1379
        %1471 = vmatpush1.msra.mxu0 %v1378
        %1472 = vmatprep.subr.mxu0 %v1383
        %1473 = vmatpush1.msra.mxu0 %v1382
        %1474 = vmatprep.subr.mxu0 0.0
        %1475 = vmatpush1.msra.mxu0 0.0
        %1476 = vmatprep.subr.mxu0 0.0
        %1477 = vmatpush1.msra.mxu0 0.0
        %1478 = vmatprep.subr.mxu0 0.0
        %1479 = vmatpush1.msra.mxu0 0.0
        %1480 = vmatprep.subr.mxu0 0.0
        %1481 = vmatpush1.msra.mxu0 0.0
        %1482 = vmatprep.subr.mxu0 0.0
        %1483 = vmatpush1.msra.mxu0 0.0
        %1484 = vmatprep.subr.mxu0 0.0
        %1485 = vmatpush1.msra.mxu0 0.0
        %1486 = vmatprep.subr.mxu0 0.0
        %1487 = vmatpush1.msra.mxu0 0.0
        %1488 = vmatprep.subr.mxu0 0.0
        %1489 = vmatpush1.msra.mxu0 0.0
        %1490 = vmatprep.subr.mxu0 0.0
        %1491 = vmatpush1.msra.mxu0 0.0
        %1492 = vmatprep.subr.mxu0 0.0
        %1493 = vmatpush1.msra.mxu0 0.0
        %1494 = vmatprep.subr.mxu0 0.0
        %1495 = vmatpush1.msra.mxu0 0.0
        %1496 = vmatprep.subr.mxu0 0.0
        %1497 = vmatpush1.msra.mxu0 0.0
        %1498 = vmatprep.subr.mxu0 0.0
        %1499 = vmatpush1.msra.mxu0 0.0
        %1500 = vmatprep.subr.mxu0 0.0
        %1501 = vmatpush1.msra.mxu0 0.0
        %1502 = vmatprep.subr.mxu0 0.0
        %1503 = vmatpush1.msra.mxu0 0.0
        %1504 = vmatprep.subr.mxu0 0.0
        %1505 = vmatpush1.msra.mxu0 0.0
        %1506 = vmatprep.subr.mxu0 0.0
        %1507 = vmatpush1.msra.mxu0 0.0
        %1508 = vmatprep.subr.mxu0 0.0
        %1509 = vmatpush1.msra.mxu0 0.0
        %1510 = vmatprep.subr.mxu0 0.0
        %1511 = vmatpush1.msra.mxu0 0.0
        %1512 = vmatprep.subr.mxu0 0.0
        %1513 = vmatpush1.msra.mxu0 0.0
        %1514 = vmatprep.subr.mxu0 0.0
        %1515 = vmatpush1.msra.mxu0 0.0
        %1516 = vmatprep.subr.mxu0 0.0
        %1517 = vmatpush1.msra.mxu0 0.0
        %1518 = vmatprep.subr.mxu0 0.0
        %1519 = vmatpush1.msra.mxu0 0.0
        %1520 = vmatprep.subr.mxu0 0.0
        %1521 = vmatpush1.msra.mxu0 0.0
        %1522 = vmatprep.subr.mxu0 0.0
        %1523 = vmatpush1.msra.mxu0 0.0
        %1524 = vmatprep.subr.mxu0 0.0
        %1525 = vmatpush1.msra.mxu0 0.0
        %1526 = vmatprep.subr.mxu0 0.0
        %1527 = vmatpush1.msra.mxu0 0.0
        %1528 = vmatprep.subr.mxu0 0.0
        %1529 = vmatpush1.msra.mxu0 0.0
        %1530 = vmatprep.subr.mxu0 0.0
        %1531 = vmatpush1.msra.mxu0 0.0
        %1532 = vmatprep.subr.mxu0 0.0
        %1533 = vmatpush1.msra.mxu0 0.0
        %1534 = vmatprep.mubr.f32.mxu0 0.0
        %1535 = vmatmul.mubr.f32.gmra.mrb[0].mxu0 %v1397
        %v1536 = vpop.f32.mrb[0].mxu0
        %v1537 = vadd.f32 %v1394, %v1536
        %v1538 = vpop.f32.mrb[0].mxu0
        %v1539 = vadd.f32 %v1394, %v1538
        %1540 = vdwg.mxu0
        %v1541 = vxor.u32 %v1466, 2147483648
        %v1542 = vxor.u32 %v1468, 2147483648
        %v1543 = vxor.u32 %v1537, 2147483648
        %v1544 = vxor.u32 %v1539, 2147483648
        %v1545 = vmul.f32 %v1541, 1.442695
        %v1546 = vpow.pop %v1545
        %v1547 = vmul.f32 %v1542, 1.442695
        %v1548 = vpow.pop %v1547
        %v1549 = vmul.f32 %v1543, 1.442695
        %v1550 = vpow.pop %v1549
        %v1551 = vmul.f32 %v1544, 1.442695
        %v1552 = vpow.pop %v1551
        %v1553 = vadd.f32 %v1546, 1.0
        %v1554 = vadd.f32 %v1548, 1.0
        %v1555 = vadd.f32 %v1550, 1.0
        %v1556 = vadd.f32 %v1552, 1.0
        %v1557 = vrcp.pop %v1553
        %v1558 = vmul.f32 1.0, %v1557
        %v1559 = vrcp.pop %v1554
        %v1560 = vmul.f32 1.0, %v1559
        %v1561 = vrcp.pop %v1555
        %v1562 = vmul.f32 1.0, %v1561
        %v1563 = vrcp.pop %v1556
        %v1564 = vmul.f32 1.0, %v1563
        %v1569 = vcombine.low %v1558, %v1560
        %v1570 = vcombine.low %v1562, %v1564
        %v1572 = vunpack.c.l.s4 1966171168
        %v1573 = vunpack.c.0.s8 %v1572
        %v1574 = vlaneseq
        %v1575 = vshrl.u32 %v1574, 7
        %v1576 = vsub.s32 %v1573, %v1575
        %v1577 = vrot.slane %v1569, %v1576
        %v1579 = vunpack.c.l.s4 1966171168
        %v1580 = vunpack.c.0.s8 %v1579
        %v1581 = vlaneseq
        %v1582 = vshrl.u32 %v1581, 7
        %v1583 = vsub.s32 %v1580, %v1582
        %v1584 = vrot.slane %v1570, %v1583
        %v1585 = vcombine.low %v1577, %v1584
        %v1587 = vunpack.c.l.s4 1966171168
        %v1588 = vunpack.c.0.s8 %v1587
        %v1589 = vlaneseq
        %v1590 = vshrl.u32 %v1589, 7
        %v1591 = vsub.s32 %v1588, %v1590
        %v1592 = vrot.slane %v1585, %v1591
        %v1594 = vlaneseq
        %vm1595 = vcmp.ge.s32.totalorder %v1594, 0
        %vm1596 = vcmp.lt.s32.totalorder %v1594, 512
        %vm1597 = vmand %vm1595, %vm1596
        %1598 = vst.msk [vmem:[%s328] sm:$0xf] %vm1597, %v1592
        %s1599 = sand.u32 %s227, 1
        %s1600 = scalar_lea.sflag [#allocation4], %s1599
        %s1601 = sand.u32 %s227, 1
        %s1602 = smul.addr %s1601, 4
        %s1603 = scalar_lea.vmem [#allocation3], %s1602
        // Predicated region
        $region57: #{tpu_custom_call.1} parent=55 // pred_check
          %p1604 = pneg %p237
        $region58: #{tpu_custom_call.1} parent=55 // pred_check_branch
          %1606 = sbr.rel (%p1604) target = $region60
        $region59: #{tpu_custom_call.1} parent=55 // pred_region
          %s1607 = smul.u32 4, %s25
          %s1609 = ssub.s32 64, 64
          %1610 = vsyncadd %s1600, %s1609
          %s1611 = smul.addr %s1607, 16
          %s1612 = scalar_lea.hbm %s9, %s1611
          %s1614 = sshll.u32 %s1603, 4
          %s1615 = int_to_ptr.vmem [resolvable:$true] %s1614
          %1617 = dma.vmem_to_hbm [thread:$0]  %s1615, 64, %s1612, %s1600
        $region60: #{tpu_custom_call.1} parent=55 // pred_fallthru
          _
      $region56: #{tpu_custom_call.1} parent=5 // pred_fallthru
        _
      %p1618 = scmp.le.s32.totalorder 2, %s20
      // Predicated region
      $region61: #{tpu_custom_call.1} parent=5 // pred_check
        %p1619 = pneg %p1618
      $region62: #{tpu_custom_call.1} parent=5 // pred_check_branch
        %1621 = sbr.rel (%p1619) target = $region64
      $region63: #{tpu_custom_call.1} parent=5 // pred_region
        %s1622 = ssub.s32 %s20, 2
        // Predicated region
        $region65: #{tpu_custom_call.1} parent=63 // pred_check
          %p1623 = pneg %p243
        $region66: #{tpu_custom_call.1} parent=63 // pred_check_branch
          %1625 = sbr.rel (%p1623) target = $region68
        $region67: #{tpu_custom_call.1} parent=63 // pred_region
          %s1626 = sand.u32 %s228, 1
          %s1627 = scalar_lea.sflag [#allocation4], %s1626
          %s1628 = sand.u32 %s228, 1
          %s1629 = smul.addr %s1628, 4
          %s1630 = scalar_lea.vmem [#allocation3], %s1629
          %1631 = dma.done %s1627, 64
        $region68: #{tpu_custom_call.1} parent=63 // pred_fallthru
          _
      $region64: #{tpu_custom_call.1} parent=5 // pred_fallthru
        _
    $region6: #{tpu_custom_call.1} parent=1 // loop_footer
      %s24 = sadd.s32 1, %s20
    $region7: #{tpu_custom_call.1} parent=1 // loop_footer_branch
      %19 = sbr.rel target = $region3
    $region8: #{tpu_custom_call.1} parent=1 // loop_exit
      _
    %1632 = vsyncpa [#allocation4], 1
    %s1633 = scalar_lea.sflag [#allocation4], 1
    %1634 = vsyncpa %s1633, 1

</llo_original>
